<compile_context>
chip_gen: v5e
topology: v5e:2x2
jax: 0.10.0
libtpu: 0.0.40
codegen_flags: <defaults>
</compile_context>

<pallas_src>
import functools

import jax
import jax.numpy as jnp
from jax.experimental import pallas as pl
from jax.experimental.pallas import tpu as pltpu


def _round_up(n, m):
    return ((n + m - 1) // m) * m


def _sigmoid_eup(z):
    # exp -> EUP, approx reciprocal -> EUP; avoids the full-precision VPU
    # divide that the default sigmoid lowering tends to emit.
    return pl.reciprocal(1.0 + jnp.exp(-z), approx=True)


def _resident_spec(shape):
    # Constant index_map -> same block every grid step -> stays resident in
    # VMEM (no per-step DMA).
    nd = len(shape)
    return pl.BlockSpec(shape, lambda i, _nd=nd: (0,) * _nd)


def _mlp_kernel(x_ref, w1_ref, b1_ref, w2_ref, b2_ref, w3_ref, b3_ref, o_ref,
                *, n_classes):
    # x tile arrives as f32 straight from HBM; cast to bf16 in-kernel (VPU,
    # essentially free) instead of materializing a bf16 copy of x in HBM.
    x = x_ref[...].astype(jnp.bfloat16)

    # dense1 + sigmoid (bf16 x bf16 -> f32 accumulation on the MXU)
    z1 = jnp.dot(x, w1_ref[...], preferred_element_type=jnp.float32) + b1_ref[...]
    h1 = _sigmoid_eup(z1).astype(jnp.bfloat16)

    # dense2 + sigmoid
    z2 = jnp.dot(h1, w2_ref[...], preferred_element_type=jnp.float32) + b2_ref[...]
    h2 = _sigmoid_eup(z2).astype(jnp.bfloat16)

    # out_layer (output feature dim padded to a lane-dense 128-wide block)
    logits = jnp.dot(h2, w3_ref[...], preferred_element_type=jnp.float32) + b3_ref[...]

    # Mask padded class lanes so they don't corrupt the log_softmax normalizer.
    lane = jax.lax.broadcasted_iota(jnp.int32, logits.shape, 1)
    logits = jnp.where(lane < n_classes, logits, -jnp.inf)

    # Numerically-stable log_softmax over the last axis (f32 math, bf16 store).
    m = jnp.max(logits, axis=-1, keepdims=True)
    shifted = logits - m
    lse = jnp.log(jnp.sum(jnp.exp(shifted), axis=-1, keepdims=True))
    o_ref[...] = (shifted - lse).astype(o_ref.dtype)


def prepare_params(params):
    """Pad hidden/output dims to multiples of 128 lanes and cast matmul
    operands to bf16 (biases stay f32). Layout is (in, out)."""
    def pad_to(a, rows, cols):
        return jnp.pad(a, ((0, rows - a.shape[0]), (0, cols - a.shape[1])))

    w1, b1 = params["w1"], params["b1"]
    w2, b2 = params["w2"], params["b2"]
    w3, b3 = params["w3"], params["b3"]
    f_in = w1.shape[0]
    h1p = _round_up(w1.shape[1], 128)
    h2p = _round_up(w2.shape[1], 128)
    ncp = _round_up(w3.shape[1], 128)
    return {
        "w1": pad_to(w1, f_in, h1p).astype(jnp.bfloat16),
        "b1": pad_to(b1, 1, h1p).astype(jnp.float32),
        "w2": pad_to(w2, h1p, h2p).astype(jnp.bfloat16),
        "b2": pad_to(b2, 1, h2p).astype(jnp.float32),
        "w3": pad_to(w3, h2p, ncp).astype(jnp.bfloat16),
        "b3": pad_to(b3, 1, ncp).astype(jnp.float32),
    }


def net_forward(x, prepared, *, n_classes=10, out_dtype=jnp.bfloat16):
    """x: (B, C, H, W) or (B, F), f32. prepared: output of prepare_params."""
    B = x.shape[0]
    x2d = x.reshape(B, -1)                              # torch .view(B, -1); stays f32
    f_in = x2d.shape[1]

    w1, b1 = prepared["w1"], prepared["b1"]             # (784, 512), (1, 512)
    w2, b2 = prepared["w2"], prepared["b2"]             # (512, 512), (1, 512)
    w3, b3 = prepared["w3"], prepared["b3"]             # (512, 128), (1, 128)
    H1, H2, NC = w1.shape[1], w2.shape[1], w3.shape[1]

    # Batch tiling:
    #  * B <= 8: one full-batch block (block == full dim -> no padding needed).
    #  * otherwise: at least 2 grid steps so dimension_semantics=("parallel",)
    #    can shard the batch across v7x's two TensorCores, with the per-step
    #    tile capped at 1024 rows so per-step compute amortizes the ~0.35 us
    #    grid overhead on single-TC v5e/v6e.
    if B <= 8:
        TB, B_pad = B, B
    else:
        TB = min(1024, _round_up(pl.cdiv(B, 2), 8))
        B_pad = _round_up(B, TB)

    x_in = x2d if B_pad == B else jnp.pad(x2d, ((0, B_pad - B), (0, 0)))

    # Honest VMEM budget: double-buffered x/out tiles + resident params
    # (conservatively counted twice) + headroom for compute temporaries.
    x_bytes = TB * f_in * x_in.dtype.itemsize
    o_bytes = TB * NC * jnp.dtype(out_dtype).itemsize
    p_bytes = sum(int(a.size) * a.dtype.itemsize for a in (w1, b1, w2, b2, w3, b3))
    vmem_limit = int(2 * (x_bytes + o_bytes) + 2 * p_bytes + (12 << 20))

    cost = pl.CostEstimate(
        flops=2 * B_pad * (f_in * H1 + H1 * H2 + H2 * NC),
        transcendentals=B_pad * (H1 + H2 + NC),
        bytes_accessed=int(x_in.size * x_in.dtype.itemsize
                           + B_pad * NC * jnp.dtype(out_dtype).itemsize
                           + p_bytes),
    )

    out = pl.pallas_call(
        functools.partial(_mlp_kernel, n_classes=n_classes),
        out_shape=jax.ShapeDtypeStruct((B_pad, NC), out_dtype),
        grid=(B_pad // TB,),
        in_specs=[pl.BlockSpec((TB, f_in), lambda i: (i, 0)),
                  _resident_spec(w1.shape), _resident_spec(b1.shape),
                  _resident_spec(w2.shape), _resident_spec(b2.shape),
                  _resident_spec(w3.shape), _resident_spec(b3.shape)],
        out_specs=pl.BlockSpec((TB, NC), lambda i: (i, 0)),
        compiler_params=pltpu.CompilerParams(
            dimension_semantics=("parallel",),      # shards batch across TCs (v7x)
            vmem_limit_bytes=vmem_limit),
        cost_estimate=cost,
    )(x_in, w1, b1, w2, b2, w3, b3)

    # Strip batch padding and padded class lanes. (If the consumer can read
    # the padded (B_pad, 128) lane-dense buffer directly, return `out` and
    # fuse this slice into the consumer instead.)
    return out[:B, :n_classes]


def init_params(key, layer_size=(784, 500, 500, 10)):
    """Deterministic init (uniform, mimicking nn.Linear's fan_in scaling).
    Stored transposed to (in, out) layout, f32, unpadded."""
    ks = jax.random.split(key, 6)

    def linear(kw, kb, fan_in, fan_out):
        bound = 1.0 / jnp.sqrt(fan_in)
        w = jax.random.uniform(kw, (fan_in, fan_out), jnp.float32, -bound, bound)
        b = jax.random.uniform(kb, (1, fan_out), jnp.float32, -bound, bound)
        return w, b

    w1, b1 = linear(ks[0], ks[1], layer_size[0], layer_size[1])
    w2, b2 = linear(ks[2], ks[3], layer_size[1], layer_size[2])
    w3, b3 = linear(ks[4], ks[5], layer_size[2], layer_size[3])
    return {"w1": w1, "b1": b1, "w2": w2, "b2": b2, "w3": w3, "b3": b3}


def _reference(x, p):
    B = x.shape[0]
    h = x.reshape(B, -1).astype(jnp.float32)
    h = jax.nn.sigmoid(h @ p["w1"] + p["b1"])
    h = jax.nn.sigmoid(h @ p["w2"] + p["b2"])
    logits = h @ p["w3"] + p["b3"]
    return jax.nn.log_softmax(logits, axis=-1)


if __name__ == "__main__":
    key = jax.random.PRNGKey(0)
    kx, kp = jax.random.split(key)

    # MNIST-like input implied by layer_size[0] == 784: (B, 1, 28, 28), NCHW
    x = jax.random.normal(kx, (2, 1, 28, 28), dtype=jnp.float32)
    params = init_params(kp)
    prepared = prepare_params(params)

    out = net_forward(x, prepared, n_classes=10)
    out = jax.block_until_ready(out)

    ref = _reference(x, params)
    assert out.shape == (2, 10)
    out_f32 = out.astype(jnp.float32)
    # bf16 matmul operands / bf16 output / approx-EUP sigmoid vs. pure-f32 ref.
    assert jnp.allclose(out_f32, ref, atol=5e-2, rtol=5e-2), (
        f"max abs err {jnp.max(jnp.abs(out_f32 - ref))}")

    print("KERNEL_OK")
</pallas_src>

<mosaic_0001>
module attributes {stable_mosaic.version = 11 : i64} {
  func.func @_mlp_kernel(%arg0: i32, %arg1: memref<2x784xf32, #tpu.memory_space<vmem>>, %arg2: memref<784x512xbf16, #tpu.memory_space<vmem>>, %arg3: memref<1x512xf32, #tpu.memory_space<vmem>>, %arg4: memref<512x512xbf16, #tpu.memory_space<vmem>>, %arg5: memref<1x512xf32, #tpu.memory_space<vmem>>, %arg6: memref<512x128xbf16, #tpu.memory_space<vmem>>, %arg7: memref<1x128xf32, #tpu.memory_space<vmem>>, %arg8: memref<2x128xbf16, #tpu.memory_space<vmem>>) attributes {dimension_semantics = [#tpu.dimension_semantics<parallel>], iteration_bounds = array<i64: 1>, scalar_prefetch = 0 : i64, scratch_operands = 0 : i64, tpu.core_type = #tpu.core_type<tc>, window_params = [{transform_indices = @transform_0, window_bounds = array<i64: 2, 784>}, {pipeline_mode = #tpu.pipeline_mode<synchronous>, transform_indices = @transform_1, window_bounds = array<i64: 784, 512>}, {pipeline_mode = #tpu.pipeline_mode<synchronous>, transform_indices = @transform_2, window_bounds = array<i64: 1, 512>}, {pipeline_mode = #tpu.pipeline_mode<synchronous>, transform_indices = @transform_3, window_bounds = array<i64: 512, 512>}, {pipeline_mode = #tpu.pipeline_mode<synchronous>, transform_indices = @transform_4, window_bounds = array<i64: 1, 512>}, {pipeline_mode = #tpu.pipeline_mode<synchronous>, transform_indices = @transform_5, window_bounds = array<i64: 512, 128>}, {pipeline_mode = #tpu.pipeline_mode<synchronous>, transform_indices = @transform_6, window_bounds = array<i64: 1, 128>}, {transform_indices = @transform_7, window_bounds = array<i64: 2, 128>}]} {
    %c0 = arith.constant 0 : index
    %c0_0 = arith.constant 0 : index
    %0 = vector.load %arg1[%c0, %c0_0] : memref<2x784xf32, #tpu.memory_space<vmem>>, vector<2x784xf32>
    %1 = arith.truncf %0 : vector<2x784xf32> to vector<2x784xbf16>
    %c0_1 = arith.constant 0 : index
    %c0_2 = arith.constant 0 : index
    %2 = vector.load %arg2[%c0_1, %c0_2] : memref<784x512xbf16, #tpu.memory_space<vmem>>, vector<784x512xbf16>
    %cst = arith.constant dense<0.000000e+00> : vector<2x512xf32>
    %3 = tpu.matmul %1, %2, %cst {dimension_numbers = #tpu.dot_dimension_numbers<[1], [0], [0], [1], [0, 0, 1, 1], [], []>} : vector<2x784xbf16>, vector<784x512xbf16>, vector<2x512xf32> -> vector<2x512xf32>
    %c0_3 = arith.constant 0 : index
    %c0_4 = arith.constant 0 : index
    %4 = vector.load %arg3[%c0_3, %c0_4] : memref<1x512xf32, #tpu.memory_space<vmem>>, vector<1x512xf32>
    %5 = vector.broadcast %4 : vector<1x512xf32> to vector<2x512xf32>
    %6 = arith.addf %3, %5 : vector<2x512xf32>
    %cst_5 = arith.constant 0.000000e+00 : f32
    %7 = vector.broadcast %cst_5 : f32 to vector<2x512xf32>
    %8 = arith.subf %7, %6 : vector<2x512xf32>
    %9 = math.exp %8 : vector<2x512xf32>
    %cst_6 = arith.constant 1.000000e+00 : f32
    %10 = vector.broadcast %cst_6 : f32 to vector<2x512xf32>
    %11 = arith.addf %10, %9 : vector<2x512xf32>
    %12 = tpu.reciprocal %11 {approx = true} : vector<2x512xf32> -> vector<2x512xf32>
    %13 = arith.truncf %12 : vector<2x512xf32> to vector<2x512xbf16>
    %c0_7 = arith.constant 0 : index
    %c0_8 = arith.constant 0 : index
    %14 = vector.load %arg4[%c0_7, %c0_8] : memref<512x512xbf16, #tpu.memory_space<vmem>>, vector<512x512xbf16>
    %cst_9 = arith.constant dense<0.000000e+00> : vector<2x512xf32>
    %15 = tpu.matmul %13, %14, %cst_9 {dimension_numbers = #tpu.dot_dimension_numbers<[1], [0], [0], [1], [0, 0, 1, 1], [], []>} : vector<2x512xbf16>, vector<512x512xbf16>, vector<2x512xf32> -> vector<2x512xf32>
    %c0_10 = arith.constant 0 : index
    %c0_11 = arith.constant 0 : index
    %16 = vector.load %arg5[%c0_10, %c0_11] : memref<1x512xf32, #tpu.memory_space<vmem>>, vector<1x512xf32>
    %17 = vector.broadcast %16 : vector<1x512xf32> to vector<2x512xf32>
    %18 = arith.addf %15, %17 : vector<2x512xf32>
    %cst_12 = arith.constant 0.000000e+00 : f32
    %19 = vector.broadcast %cst_12 : f32 to vector<2x512xf32>
    %20 = arith.subf %19, %18 : vector<2x512xf32>
    %21 = math.exp %20 : vector<2x512xf32>
    %cst_13 = arith.constant 1.000000e+00 : f32
    %22 = vector.broadcast %cst_13 : f32 to vector<2x512xf32>
    %23 = arith.addf %22, %21 : vector<2x512xf32>
    %24 = tpu.reciprocal %23 {approx = true} : vector<2x512xf32> -> vector<2x512xf32>
    %25 = arith.truncf %24 : vector<2x512xf32> to vector<2x512xbf16>
    %c0_14 = arith.constant 0 : index
    %c0_15 = arith.constant 0 : index
    %26 = vector.load %arg6[%c0_14, %c0_15] : memref<512x128xbf16, #tpu.memory_space<vmem>>, vector<512x128xbf16>
    %cst_16 = arith.constant dense<0.000000e+00> : vector<2x128xf32>
    %27 = tpu.matmul %25, %26, %cst_16 {dimension_numbers = #tpu.dot_dimension_numbers<[1], [0], [0], [1], [0, 0, 1, 1], [], []>} : vector<2x512xbf16>, vector<512x128xbf16>, vector<2x128xf32> -> vector<2x128xf32>
    %c0_17 = arith.constant 0 : index
    %c0_18 = arith.constant 0 : index
    %28 = vector.load %arg7[%c0_17, %c0_18] : memref<1x128xf32, #tpu.memory_space<vmem>>, vector<1x128xf32>
    %29 = vector.broadcast %28 : vector<1x128xf32> to vector<2x128xf32>
    %30 = arith.addf %27, %29 : vector<2x128xf32>
    %31 = tpu.iota {dimensions = array<i32: 1>} : vector<2x128xi32>
    %c10_i32 = arith.constant 10 : i32
    %32 = vector.broadcast %c10_i32 : i32 to vector<2x128xi32>
    %33 = arith.cmpi slt, %31, %32 : vector<2x128xi32>
    %cst_19 = arith.constant 0xFF800000 : f32
    %34 = vector.broadcast %cst_19 : f32 to vector<2x128xf32>
    %35 = arith.select %33, %30, %34 : vector<2x128xi1>, vector<2x128xf32>
    %cst_20 = arith.constant dense<0xFF800000> : vector<2xf32>
    %36 = vector.multi_reduction <maximumf>, %35, %cst_20 [1] : vector<2x128xf32> to vector<2xf32>
    %37 = vector.shape_cast %36 : vector<2xf32> to vector<2x1xf32>
    %38 = vector.broadcast %37 : vector<2x1xf32> to vector<2x128xf32>
    %39 = arith.subf %35, %38 : vector<2x128xf32>
    %40 = math.exp %39 : vector<2x128xf32>
    %cst_21 = arith.constant dense<0.000000e+00> : vector<2xf32>
    %41 = vector.multi_reduction <add>, %40, %cst_21 [1] : vector<2x128xf32> to vector<2xf32>
    %42 = vector.shape_cast %41 : vector<2xf32> to vector<2x1xf32>
    %43 = math.log %42 : vector<2x1xf32>
    %44 = vector.broadcast %43 : vector<2x1xf32> to vector<2x128xf32>
    %45 = arith.subf %39, %44 : vector<2x128xf32>
    %46 = arith.truncf %45 : vector<2x128xf32> to vector<2x128xbf16>
    %c0_22 = arith.constant 0 : index
    %c0_23 = arith.constant 0 : index
    %47 = vector.load %arg8[%c0_22, %c0_23] : memref<2x128xbf16, #tpu.memory_space<vmem>>, vector<2x128xbf16>
    tpu.vector_store %arg8[%c0_22, %c0_23], %46 {strides = array<i32>} : memref<2x128xbf16, #tpu.memory_space<vmem>>, vector<2x128xbf16>,
    return
  }
  func.func @transform_0(%arg0: i32) -> (i32, i32) {
    %c0_i32 = arith.constant 0 : i32
    %c0_i32_0 = arith.constant 0 : i32
    return %arg0, %c0_i32 : i32, i32
  }
  func.func @transform_1(%arg0: i32) -> (i32, i32) {
    %c0_i32 = arith.constant 0 : i32
    %c0_i32_0 = arith.constant 0 : i32
    %c0_i32_1 = arith.constant 0 : i32
    return %c0_i32, %c0_i32_0 : i32, i32
  }
  func.func @transform_2(%arg0: i32) -> (i32, i32) {
    %c0_i32 = arith.constant 0 : i32
    %c0_i32_0 = arith.constant 0 : i32
    %c0_i32_1 = arith.constant 0 : i32
    return %c0_i32, %c0_i32_0 : i32, i32
  }
  func.func @transform_3(%arg0: i32) -> (i32, i32) {
    %c0_i32 = arith.constant 0 : i32
    %c0_i32_0 = arith.constant 0 : i32
    %c0_i32_1 = arith.constant 0 : i32
    return %c0_i32, %c0_i32_0 : i32, i32
  }
  func.func @transform_4(%arg0: i32) -> (i32, i32) {
    %c0_i32 = arith.constant 0 : i32
    %c0_i32_0 = arith.constant 0 : i32
    %c0_i32_1 = arith.constant 0 : i32
    return %c0_i32, %c0_i32_0 : i32, i32
  }
  func.func @transform_5(%arg0: i32) -> (i32, i32) {
    %c0_i32 = arith.constant 0 : i32
    %c0_i32_0 = arith.constant 0 : i32
    %c0_i32_1 = arith.constant 0 : i32
    return %c0_i32, %c0_i32_0 : i32, i32
  }
  func.func @transform_6(%arg0: i32) -> (i32, i32) {
    %c0_i32 = arith.constant 0 : i32
    %c0_i32_0 = arith.constant 0 : i32
    %c0_i32_1 = arith.constant 0 : i32
    return %c0_i32, %c0_i32_0 : i32, i32
  }
  func.func @transform_7(%arg0: i32) -> (i32, i32) {
    %c0_i32 = arith.constant 0 : i32
    %c0_i32_0 = arith.constant 0 : i32
    return %arg0, %c0_i32 : i32, i32
  }
}

</mosaic_0001>

<llo_original>
// kernel: tpu_custom_call.1
$region0: #{tpu_custom_call.1}
  #allocation0 [shape = 'u32[]', space=smem, size = 0x4, offset = 0x4, fixed_abs, tag = 'smem constant byte address 0x4 - core index']
  #allocation1 [shape = 'u32[72,128]{1,0:T(1,128)}', space=vmem, size = 0x9000, scoped, tag = 'internal scratch']
  %s0 = inlined_call_operand.hbm [shape: f32[2,784], index: 0, kind: input, shape index: {}]
  %s1 = inlined_call_operand.hbm [shape: bf16[784,512], index: 1, kind: input, shape index: {}]
  %s2 = inlined_call_operand.hbm [shape: f32[1,512], index: 2, kind: input, shape index: {}]
  %s3 = inlined_call_operand.hbm [shape: bf16[512,512], index: 3, kind: input, shape index: {}]
  %s4 = inlined_call_operand.hbm [shape: f32[1,512], index: 4, kind: input, shape index: {}]
  %s5 = inlined_call_operand.hbm [shape: bf16[512,128], index: 5, kind: input, shape index: {}]
  %s6 = inlined_call_operand.vmem [shape: f32[1,128], index: 6, kind: input, shape index: {}]
  %s7 = inlined_call_operand.hbm [shape: bf16[2,128], index: 7, kind: output, shape index: {}]
  %s8 = sld [smem:[#allocation0]]
  $region62: #{tpu_custom_call.1} parent=0
    _
  %s10 = ssub.s32 1, %s8
  %s11 = scalar_select 0, %s10, %s8
  $region1: #{tpu_custom_call.1} parent=0
    #allocation2 [shape = 'u8[7168]{0}', space=vmem, size = 0x1c00, scoped, tag = 'input window, operand 0, single buffered']
    #allocation3 [shape = 's32[1]{0}', space=sflag, size = 0x4, scoped, tag = 'scoped memory for tpu_custom_call.1']
    #allocation4 [shape = 's32[1]{0}', space=sflag, size = 0x4, scoped, tag = 'scoped memory for tpu_custom_call.1']
    #allocation5 [shape = 'u8[802816]{0}', space=vmem, size = 0xc4000, scoped, tag = 'input window, operand 1, single buffered']
    #allocation6 [shape = 's32[1]{0}', space=sflag, size = 0x4, scoped, tag = 'scoped memory for tpu_custom_call.1']
    #allocation7 [shape = 'u8[2048]{0}', space=vmem, size = 0x800, scoped, tag = 'input window, operand 2, single buffered']
    #allocation8 [shape = 'u8[524288]{0}', space=vmem, size = 0x80000, scoped, tag = 'input window, operand 3, single buffered']
    #allocation9 [shape = 's32[1]{0}', space=sflag, size = 0x4, scoped, tag = 'scoped memory for tpu_custom_call.1']
    #allocation10 [shape = 'u8[2048]{0}', space=vmem, size = 0x800, scoped, tag = 'input window, operand 4, single buffered']
    #allocation11 [shape = 'u8[131072]{0}', space=vmem, size = 0x20000, scoped, tag = 'input window, operand 5, single buffered']
    #allocation12 [shape = 's32[1]{0}', space=sflag, size = 0x4, scoped, tag = 'scoped memory for tpu_custom_call.1']
    #allocation13 [shape = 'u8[512]{0}', space=vmem, size = 0x400, scoped, tag = 'output window, operand 0, single buffered']
    %12 = vsyncpa [#allocation3], 0
    %13 = vsyncpa [#allocation6], 0
    %14 = vsyncpa [#allocation9], 0
    %15 = vsyncpa [#allocation12], 0
    %16 = vsyncpa [#allocation4], 0
    // Predicated region
    $region2: #{tpu_custom_call.1} parent=1 // pred_check
      _
    $region3: #{tpu_custom_call.1} parent=1 // pred_check_branch
      %18 = sbr.rel (0) target = $region5
    $region4: #{tpu_custom_call.1} parent=1 // pred_region
      %20 = vsyncadd [#allocation3], 0
      %s22 = sshll.u32 %s0, 4
      %s23 = int_to_ptr.hbm [resolvable:$true] %s22
      %s24 = sshll.u32 [#allocation2], 4
      %s25 = int_to_ptr.vmem [resolvable:$true] %s24
      %27 = dma.hbm_to_vmem [thread:$0]  %s23, 224, %s25, [#allocation3]
    $region5: #{tpu_custom_call.1} parent=1 // pred_fallthru
      _
    // Predicated region
    $region6: #{tpu_custom_call.1} parent=1 // pred_check
      _
    $region7: #{tpu_custom_call.1} parent=1 // pred_check_branch
      %29 = sbr.rel (0) target = $region9
    $region8: #{tpu_custom_call.1} parent=1 // pred_region
      %31 = vsyncadd [#allocation6], 0
      %s32 = sshll.u32 %s1, 4
      %s33 = int_to_ptr.hbm [resolvable:$true] %s32
      %s34 = sshll.u32 [#allocation5], 4
      %s35 = int_to_ptr.vmem [resolvable:$true] %s34
      %40 = dma.hbm_to_vmem [thread:$0]  %s33, 25088, %s35, [#allocation6], 256, 256, 16
    $region9: #{tpu_custom_call.1} parent=1 // pred_fallthru
      _
    // Predicated region
    $region10: #{tpu_custom_call.1} parent=1 // pred_check
      _
    $region11: #{tpu_custom_call.1} parent=1 // pred_check_branch
      %42 = sbr.rel (0) target = $region13
    $region12: #{tpu_custom_call.1} parent=1 // pred_region
      %44 = vsyncadd [#allocation6], 0
      %s46 = sshll.u32 %s2, 4
      %s47 = int_to_ptr.hbm [resolvable:$true] %s46
      %s48 = sshll.u32 [#allocation7], 4
      %s49 = int_to_ptr.vmem [resolvable:$true] %s48
      %51 = dma.hbm_to_vmem [thread:$0]  %s47, 64, %s49, [#allocation6]
    $region13: #{tpu_custom_call.1} parent=1 // pred_fallthru
      _
    // Predicated region
    $region14: #{tpu_custom_call.1} parent=1 // pred_check
      _
    $region15: #{tpu_custom_call.1} parent=1 // pred_check_branch
      %53 = sbr.rel (0) target = $region17
    $region16: #{tpu_custom_call.1} parent=1 // pred_region
      %55 = vsyncadd [#allocation9], 0
      %s56 = sshll.u32 %s3, 4
      %s57 = int_to_ptr.hbm [resolvable:$true] %s56
      %s58 = sshll.u32 [#allocation8], 4
      %s59 = int_to_ptr.vmem [resolvable:$true] %s58
      %64 = dma.hbm_to_vmem [thread:$0]  %s57, 16384, %s59, [#allocation9], 256, 256, 16
    $region17: #{tpu_custom_call.1} parent=1 // pred_fallthru
      _
    // Predicated region
    $region18: #{tpu_custom_call.1} parent=1 // pred_check
      _
    $region19: #{tpu_custom_call.1} parent=1 // pred_check_branch
      %66 = sbr.rel (0) target = $region21
    $region20: #{tpu_custom_call.1} parent=1 // pred_region
      %68 = vsyncadd [#allocation9], 0
      %s70 = sshll.u32 %s4, 4
      %s71 = int_to_ptr.hbm [resolvable:$true] %s70
      %s72 = sshll.u32 [#allocation10], 4
      %s73 = int_to_ptr.vmem [resolvable:$true] %s72
      %75 = dma.hbm_to_vmem [thread:$0]  %s71, 64, %s73, [#allocation9]
    $region21: #{tpu_custom_call.1} parent=1 // pred_fallthru
      _
    // Predicated region
    $region22: #{tpu_custom_call.1} parent=1 // pred_check
      _
    $region23: #{tpu_custom_call.1} parent=1 // pred_check_branch
      %77 = sbr.rel (0) target = $region25
    $region24: #{tpu_custom_call.1} parent=1 // pred_region
      %79 = vsyncadd [#allocation12], 0
      %s80 = sshll.u32 %s5, 4
      %s81 = int_to_ptr.hbm [resolvable:$true] %s80
      %s82 = sshll.u32 [#allocation11], 4
      %s83 = int_to_ptr.vmem [resolvable:$true] %s82
      %88 = dma.hbm_to_vmem [thread:$0]  %s81, 4096, %s83, [#allocation12], 64, 64, 4
    $region25: #{tpu_custom_call.1} parent=1 // pred_fallthru
      _
    // Predicated region
    $region26: #{tpu_custom_call.1} parent=1 // pred_check
      _
    $region27: #{tpu_custom_call.1} parent=1 // pred_check_branch
      %90 = sbr.rel (0) target = $region29
    $region28: #{tpu_custom_call.1} parent=1 // pred_region
      _
    $region29: #{tpu_custom_call.1} parent=1 // pred_fallthru
      _
    // Predicated region
    $region30: #{tpu_custom_call.1} parent=1 // pred_check
      _
    $region31: #{tpu_custom_call.1} parent=1 // pred_check_branch
      %92 = sbr.rel (0) target = $region33
    $region32: #{tpu_custom_call.1} parent=1 // pred_region
      %94 = dma.done [#allocation3], 224
    $region33: #{tpu_custom_call.1} parent=1 // pred_fallthru
      _
    // Predicated region
    $region34: #{tpu_custom_call.1} parent=1 // pred_check
      _
    $region35: #{tpu_custom_call.1} parent=1 // pred_check_branch
      %96 = sbr.rel (0) target = $region37
    $region36: #{tpu_custom_call.1} parent=1 // pred_region
      %98 = dma.done [#allocation6], 25088
    $region37: #{tpu_custom_call.1} parent=1 // pred_fallthru
      _
    // Predicated region
    $region38: #{tpu_custom_call.1} parent=1 // pred_check
      _
    $region39: #{tpu_custom_call.1} parent=1 // pred_check_branch
      %100 = sbr.rel (0) target = $region41
    $region40: #{tpu_custom_call.1} parent=1 // pred_region
      %102 = dma.done [#allocation6], 64
    $region41: #{tpu_custom_call.1} parent=1 // pred_fallthru
      _
    // Predicated region
    $region42: #{tpu_custom_call.1} parent=1 // pred_check
      _
    $region43: #{tpu_custom_call.1} parent=1 // pred_check_branch
      %104 = sbr.rel (0) target = $region45
    $region44: #{tpu_custom_call.1} parent=1 // pred_region
      %106 = dma.done [#allocation9], 16384
    $region45: #{tpu_custom_call.1} parent=1 // pred_fallthru
      _
    // Predicated region
    $region46: #{tpu_custom_call.1} parent=1 // pred_check
      _
    $region47: #{tpu_custom_call.1} parent=1 // pred_check_branch
      %108 = sbr.rel (0) target = $region49
    $region48: #{tpu_custom_call.1} parent=1 // pred_region
      %110 = dma.done [#allocation9], 64
    $region49: #{tpu_custom_call.1} parent=1 // pred_fallthru
      _
    // Predicated region
    $region50: #{tpu_custom_call.1} parent=1 // pred_check
      _
    $region51: #{tpu_custom_call.1} parent=1 // pred_check_branch
      %112 = sbr.rel (0) target = $region53
    $region52: #{tpu_custom_call.1} parent=1 // pred_region
      %114 = dma.done [#allocation12], 4096
    $region53: #{tpu_custom_call.1} parent=1 // pred_fallthru
      _
    %v116 = vld [vmem:[#allocation2] sm:$0xff]
    %v117 = vld [vmem:[#allocation2 + $0x8] sm:$0x3f]
    %120 = vst [vmem:[#allocation1] ss:$4 sm:$0xff] %v116
    %s121 = scalar_lea.vmem [#allocation1], 32
    %122 = vst [vmem:[%s121] ss:$4 sm:$0xff] %v117
    %v123 = vld.sshfl [vmem:[#allocation1] sm:$0xff pattern:$0x73625140]
    %v124 = vld.sshfl [vmem:[#allocation1 + $0x8] sm:$0xff pattern:$0x73625140]
    %v125 = vld.sshfl [vmem:[#allocation1 + $0x10] sm:$0xff pattern:$0x73625140]
    %v126 = vld.sshfl [vmem:[#allocation1 + $0x18] sm:$0xff pattern:$0x73625140]
    %v127 = vld.sshfl [vmem:[#allocation1 + $0x20] sm:$0xff pattern:$0x73625140]
    %v128 = vld.sshfl [vmem:[#allocation1 + $0x28] sm:$0xff pattern:$0x73625140]
    %v129 = vld.sshfl [vmem:[#allocation1 + $0x30] sm:$0xff pattern:$0x73625140]
    %v137 = vpack.c.bf16 %v123, %v123
    %v138 = vpack.c.bf16 %v124, %v124
    %v139 = vpack.c.bf16 %v125, %v125
    %v140 = vpack.c.bf16 %v126, %v126
    %v141 = vpack.c.bf16 %v127, %v127
    %v142 = vpack.c.bf16 %v128, %v128
    %v143 = vpack.c.bf16 %v129, %v129
    %v144 = vld [vmem:[#allocation5] sm:$0xff]
    %v145 = vld [vmem:[#allocation5 + $0x8] sm:$0xff]
    %v146 = vld [vmem:[#allocation5 + $0x10] sm:$0xff]
    %v147 = vld [vmem:[#allocation5 + $0x18] sm:$0xff]
    %v148 = vld [vmem:[#allocation5 + $0x20] sm:$0xff]
    %v149 = vld [vmem:[#allocation5 + $0x28] sm:$0xff]
    %v150 = vld [vmem:[#allocation5 + $0x30] sm:$0xff]
    %v151 = vld [vmem:[#allocation5 + $0x38] sm:$0xff]
    %v152 = vld [vmem:[#allocation5 + $0x40] sm:$0xff]
    %v153 = vld [vmem:[#allocation5 + $0x48] sm:$0xff]
    %v154 = vld [vmem:[#allocation5 + $0x50] sm:$0xff]
    %v155 = vld [vmem:[#allocation5 + $0x58] sm:$0xff]
    %v156 = vld [vmem:[#allocation5 + $0x60] sm:$0xff]
    %v157 = vld [vmem:[#allocation5 + $0x68] sm:$0xff]
    %v158 = vld [vmem:[#allocation5 + $0x70] sm:$0xff]
    %v159 = vld [vmem:[#allocation5 + $0x78] sm:$0xff]
    %v160 = vld [vmem:[#allocation5 + $0x80] sm:$0xff]
    %v161 = vld [vmem:[#allocation5 + $0x88] sm:$0xff]
    %v162 = vld [vmem:[#allocation5 + $0x90] sm:$0xff]
    %v163 = vld [vmem:[#allocation5 + $0x98] sm:$0xff]
    %v164 = vld [vmem:[#allocation5 + $0xa0] sm:$0xff]
    %v165 = vld [vmem:[#allocation5 + $0xa8] sm:$0xff]
    %v166 = vld [vmem:[#allocation5 + $0xb0] sm:$0xff]
    %v167 = vld [vmem:[#allocation5 + $0xb8] sm:$0xff]
    %v168 = vld [vmem:[#allocation5 + $0xc0] sm:$0xff]
    %v169 = vld [vmem:[#allocation5 + $0xc8] sm:$0xff]
    %v170 = vld [vmem:[#allocation5 + $0xd0] sm:$0xff]
    %v171 = vld [vmem:[#allocation5 + $0xd8] sm:$0xff]
    %v172 = vld [vmem:[#allocation5 + $0xe0] sm:$0xff]
    %v173 = vld [vmem:[#allocation5 + $0xe8] sm:$0xff]
    %v174 = vld [vmem:[#allocation5 + $0xf0] sm:$0xff]
    %v175 = vld [vmem:[#allocation5 + $0xf8] sm:$0xff]
    %v176 = vld [vmem:[#allocation5 + $0x100] sm:$0xff]
    %v177 = vld [vmem:[#allocation5 + $0x108] sm:$0xff]
    %v178 = vld [vmem:[#allocation5 + $0x110] sm:$0xff]
    %v179 = vld [vmem:[#allocation5 + $0x118] sm:$0xff]
    %v180 = vld [vmem:[#allocation5 + $0x120] sm:$0xff]
    %v181 = vld [vmem:[#allocation5 + $0x128] sm:$0xff]
    %v182 = vld [vmem:[#allocation5 + $0x130] sm:$0xff]
    %v183 = vld [vmem:[#allocation5 + $0x138] sm:$0xff]
    %v184 = vld [vmem:[#allocation5 + $0x140] sm:$0xff]
    %v185 = vld [vmem:[#allocation5 + $0x148] sm:$0xff]
    %v186 = vld [vmem:[#allocation5 + $0x150] sm:$0xff]
    %v187 = vld [vmem:[#allocation5 + $0x158] sm:$0xff]
    %v188 = vld [vmem:[#allocation5 + $0x160] sm:$0xff]
    %v189 = vld [vmem:[#allocation5 + $0x168] sm:$0xff]
    %v190 = vld [vmem:[#allocation5 + $0x170] sm:$0xff]
    %v191 = vld [vmem:[#allocation5 + $0x178] sm:$0xff]
    %v192 = vld [vmem:[#allocation5 + $0x180] sm:$0xff]
    %v193 = vld [vmem:[#allocation5 + $0x188] sm:$0xff]
    %v194 = vld [vmem:[#allocation5 + $0x190] sm:$0xff]
    %v195 = vld [vmem:[#allocation5 + $0x198] sm:$0xff]
    %v196 = vld [vmem:[#allocation5 + $0x1a0] sm:$0xff]
    %v197 = vld [vmem:[#allocation5 + $0x1a8] sm:$0xff]
    %v198 = vld [vmem:[#allocation5 + $0x1b0] sm:$0xff]
    %v199 = vld [vmem:[#allocation5 + $0x1b8] sm:$0xff]
    %v200 = vld [vmem:[#allocation5 + $0x1c0] sm:$0xff]
    %v201 = vld [vmem:[#allocation5 + $0x1c8] sm:$0xff]
    %v202 = vld [vmem:[#allocation5 + $0x1d0] sm:$0xff]
    %v203 = vld [vmem:[#allocation5 + $0x1d8] sm:$0xff]
    %v204 = vld [vmem:[#allocation5 + $0x1e0] sm:$0xff]
    %v205 = vld [vmem:[#allocation5 + $0x1e8] sm:$0xff]
    %v206 = vld [vmem:[#allocation5 + $0x1f0] sm:$0xff]
    %v207 = vld [vmem:[#allocation5 + $0x1f8] sm:$0xff]
    %v208 = vld [vmem:[#allocation5 + $0x200] sm:$0xff]
    %v209 = vld [vmem:[#allocation5 + $0x208] sm:$0xff]
    %v210 = vld [vmem:[#allocation5 + $0x210] sm:$0xff]
    %v211 = vld [vmem:[#allocation5 + $0x218] sm:$0xff]
    %v212 = vld [vmem:[#allocation5 + $0x220] sm:$0xff]
    %v213 = vld [vmem:[#allocation5 + $0x228] sm:$0xff]
    %v214 = vld [vmem:[#allocation5 + $0x230] sm:$0xff]
    %v215 = vld [vmem:[#allocation5 + $0x238] sm:$0xff]
    %v216 = vld [vmem:[#allocation5 + $0x240] sm:$0xff]
    %v217 = vld [vmem:[#allocation5 + $0x248] sm:$0xff]
    %v218 = vld [vmem:[#allocation5 + $0x250] sm:$0xff]
    %v219 = vld [vmem:[#allocation5 + $0x258] sm:$0xff]
    %v220 = vld [vmem:[#allocation5 + $0x260] sm:$0xff]
    %v221 = vld [vmem:[#allocation5 + $0x268] sm:$0xff]
    %v222 = vld [vmem:[#allocation5 + $0x270] sm:$0xff]
    %v223 = vld [vmem:[#allocation5 + $0x278] sm:$0xff]
    %v224 = vld [vmem:[#allocation5 + $0x280] sm:$0xff]
    %v225 = vld [vmem:[#allocation5 + $0x288] sm:$0xff]
    %v226 = vld [vmem:[#allocation5 + $0x290] sm:$0xff]
    %v227 = vld [vmem:[#allocation5 + $0x298] sm:$0xff]
    %v228 = vld [vmem:[#allocation5 + $0x2a0] sm:$0xff]
    %v229 = vld [vmem:[#allocation5 + $0x2a8] sm:$0xff]
    %v230 = vld [vmem:[#allocation5 + $0x2b0] sm:$0xff]
    %v231 = vld [vmem:[#allocation5 + $0x2b8] sm:$0xff]
    %v232 = vld [vmem:[#allocation5 + $0x2c0] sm:$0xff]
    %v233 = vld [vmem:[#allocation5 + $0x2c8] sm:$0xff]
    %v234 = vld [vmem:[#allocation5 + $0x2d0] sm:$0xff]
    %v235 = vld [vmem:[#allocation5 + $0x2d8] sm:$0xff]
    %v236 = vld [vmem:[#allocation5 + $0x2e0] sm:$0xff]
    %v237 = vld [vmem:[#allocation5 + $0x2e8] sm:$0xff]
    %v238 = vld [vmem:[#allocation5 + $0x2f0] sm:$0xff]
    %v239 = vld [vmem:[#allocation5 + $0x2f8] sm:$0xff]
    %v240 = vld [vmem:[#allocation5 + $0x300] sm:$0xff]
    %v241 = vld [vmem:[#allocation5 + $0x308] sm:$0xff]
    %v242 = vld [vmem:[#allocation5 + $0x310] sm:$0xff]
    %v243 = vld [vmem:[#allocation5 + $0x318] sm:$0xff]
    %v244 = vld [vmem:[#allocation5 + $0x320] sm:$0xff]
    %v245 = vld [vmem:[#allocation5 + $0x328] sm:$0xff]
    %v246 = vld [vmem:[#allocation5 + $0x330] sm:$0xff]
    %v247 = vld [vmem:[#allocation5 + $0x338] sm:$0xff]
    %v248 = vld [vmem:[#allocation5 + $0x340] sm:$0xff]
    %v249 = vld [vmem:[#allocation5 + $0x348] sm:$0xff]
    %v250 = vld [vmem:[#allocation5 + $0x350] sm:$0xff]
    %v251 = vld [vmem:[#allocation5 + $0x358] sm:$0xff]
    %v252 = vld [vmem:[#allocation5 + $0x360] sm:$0xff]
    %v253 = vld [vmem:[#allocation5 + $0x368] sm:$0xff]
    %v254 = vld [vmem:[#allocation5 + $0x370] sm:$0xff]
    %v255 = vld [vmem:[#allocation5 + $0x378] sm:$0xff]
    %v256 = vld [vmem:[#allocation5 + $0x380] sm:$0xff]
    %v257 = vld [vmem:[#allocation5 + $0x388] sm:$0xff]
    %v258 = vld [vmem:[#allocation5 + $0x390] sm:$0xff]
    %v259 = vld [vmem:[#allocation5 + $0x398] sm:$0xff]
    %v260 = vld [vmem:[#allocation5 + $0x3a0] sm:$0xff]
    %v261 = vld [vmem:[#allocation5 + $0x3a8] sm:$0xff]
    %v262 = vld [vmem:[#allocation5 + $0x3b0] sm:$0xff]
    %v263 = vld [vmem:[#allocation5 + $0x3b8] sm:$0xff]
    %v264 = vld [vmem:[#allocation5 + $0x3c0] sm:$0xff]
    %v265 = vld [vmem:[#allocation5 + $0x3c8] sm:$0xff]
    %v266 = vld [vmem:[#allocation5 + $0x3d0] sm:$0xff]
    %v267 = vld [vmem:[#allocation5 + $0x3d8] sm:$0xff]
    %v268 = vld [vmem:[#allocation5 + $0x3e0] sm:$0xff]
    %v269 = vld [vmem:[#allocation5 + $0x3e8] sm:$0xff]
    %v270 = vld [vmem:[#allocation5 + $0x3f0] sm:$0xff]
    %v271 = vld [vmem:[#allocation5 + $0x3f8] sm:$0xff]
    %v272 = vld [vmem:[#allocation5 + $0x400] sm:$0xff]
    %v273 = vld [vmem:[#allocation5 + $0x408] sm:$0xff]
    %v274 = vld [vmem:[#allocation5 + $0x410] sm:$0xff]
    %v275 = vld [vmem:[#allocation5 + $0x418] sm:$0xff]
    %v276 = vld [vmem:[#allocation5 + $0x420] sm:$0xff]
    %v277 = vld [vmem:[#allocation5 + $0x428] sm:$0xff]
    %v278 = vld [vmem:[#allocation5 + $0x430] sm:$0xff]
    %v279 = vld [vmem:[#allocation5 + $0x438] sm:$0xff]
    %v280 = vld [vmem:[#allocation5 + $0x440] sm:$0xff]
    %v281 = vld [vmem:[#allocation5 + $0x448] sm:$0xff]
    %v282 = vld [vmem:[#allocation5 + $0x450] sm:$0xff]
    %v283 = vld [vmem:[#allocation5 + $0x458] sm:$0xff]
    %v284 = vld [vmem:[#allocation5 + $0x460] sm:$0xff]
    %v285 = vld [vmem:[#allocation5 + $0x468] sm:$0xff]
    %v286 = vld [vmem:[#allocation5 + $0x470] sm:$0xff]
    %v287 = vld [vmem:[#allocation5 + $0x478] sm:$0xff]
    %v288 = vld [vmem:[#allocation5 + $0x480] sm:$0xff]
    %v289 = vld [vmem:[#allocation5 + $0x488] sm:$0xff]
    %v290 = vld [vmem:[#allocation5 + $0x490] sm:$0xff]
    %v291 = vld [vmem:[#allocation5 + $0x498] sm:$0xff]
    %v292 = vld [vmem:[#allocation5 + $0x4a0] sm:$0xff]
    %v293 = vld [vmem:[#allocation5 + $0x4a8] sm:$0xff]
    %v294 = vld [vmem:[#allocation5 + $0x4b0] sm:$0xff]
    %v295 = vld [vmem:[#allocation5 + $0x4b8] sm:$0xff]
    %v296 = vld [vmem:[#allocation5 + $0x4c0] sm:$0xff]
    %v297 = vld [vmem:[#allocation5 + $0x4c8] sm:$0xff]
    %v298 = vld [vmem:[#allocation5 + $0x4d0] sm:$0xff]
    %v299 = vld [vmem:[#allocation5 + $0x4d8] sm:$0xff]
    %v300 = vld [vmem:[#allocation5 + $0x4e0] sm:$0xff]
    %v301 = vld [vmem:[#allocation5 + $0x4e8] sm:$0xff]
    %v302 = vld [vmem:[#allocation5 + $0x4f0] sm:$0xff]
    %v303 = vld [vmem:[#allocation5 + $0x4f8] sm:$0xff]
    %v304 = vld [vmem:[#allocation5 + $0x500] sm:$0xff]
    %v305 = vld [vmem:[#allocation5 + $0x508] sm:$0xff]
    %v306 = vld [vmem:[#allocation5 + $0x510] sm:$0xff]
    %v307 = vld [vmem:[#allocation5 + $0x518] sm:$0xff]
    %v308 = vld [vmem:[#allocation5 + $0x520] sm:$0xff]
    %v309 = vld [vmem:[#allocation5 + $0x528] sm:$0xff]
    %v310 = vld [vmem:[#allocation5 + $0x530] sm:$0xff]
    %v311 = vld [vmem:[#allocation5 + $0x538] sm:$0xff]
    %v312 = vld [vmem:[#allocation5 + $0x540] sm:$0xff]
    %v313 = vld [vmem:[#allocation5 + $0x548] sm:$0xff]
    %v314 = vld [vmem:[#allocation5 + $0x550] sm:$0xff]
    %v315 = vld [vmem:[#allocation5 + $0x558] sm:$0xff]
    %v316 = vld [vmem:[#allocation5 + $0x560] sm:$0xff]
    %v317 = vld [vmem:[#allocation5 + $0x568] sm:$0xff]
    %v318 = vld [vmem:[#allocation5 + $0x570] sm:$0xff]
    %v319 = vld [vmem:[#allocation5 + $0x578] sm:$0xff]
    %v320 = vld [vmem:[#allocation5 + $0x580] sm:$0xff]
    %v321 = vld [vmem:[#allocation5 + $0x588] sm:$0xff]
    %v322 = vld [vmem:[#allocation5 + $0x590] sm:$0xff]
    %v323 = vld [vmem:[#allocation5 + $0x598] sm:$0xff]
    %v324 = vld [vmem:[#allocation5 + $0x5a0] sm:$0xff]
    %v325 = vld [vmem:[#allocation5 + $0x5a8] sm:$0xff]
    %v326 = vld [vmem:[#allocation5 + $0x5b0] sm:$0xff]
    %v327 = vld [vmem:[#allocation5 + $0x5b8] sm:$0xff]
    %v328 = vld [vmem:[#allocation5 + $0x5c0] sm:$0xff]
    %v329 = vld [vmem:[#allocation5 + $0x5c8] sm:$0xff]
    %v330 = vld [vmem:[#allocation5 + $0x5d0] sm:$0xff]
    %v331 = vld [vmem:[#allocation5 + $0x5d8] sm:$0xff]
    %v332 = vld [vmem:[#allocation5 + $0x5e0] sm:$0xff]
    %v333 = vld [vmem:[#allocation5 + $0x5e8] sm:$0xff]
    %v334 = vld [vmem:[#allocation5 + $0x5f0] sm:$0xff]
    %v335 = vld [vmem:[#allocation5 + $0x5f8] sm:$0xff]
    %v336 = vld [vmem:[#allocation5 + $0x600] sm:$0xff]
    %v337 = vld [vmem:[#allocation5 + $0x608] sm:$0xff]
    %v338 = vld [vmem:[#allocation5 + $0x610] sm:$0xff]
    %v339 = vld [vmem:[#allocation5 + $0x618] sm:$0xff]
    %v340 = vld [vmem:[#allocation7] sm:$0xf]
    %v342 = vperm.slane %v340, 0
    %v343 = vperm.slane %v340, 1
    %v344 = vperm.slane %v340, 2
    %v345 = vperm.slane %v340, 3
    %v546 = vunpack.c.l.b16 %v144
    %v547 = vunpack.c.h.b16 %v144
    %v548 = vunpack.c.l.b16 %v145
    %v549 = vunpack.c.h.b16 %v145
    %v550 = vunpack.c.l.b16 %v146
    %v551 = vunpack.c.h.b16 %v146
    %v552 = vunpack.c.l.b16 %v147
    %v553 = vunpack.c.h.b16 %v147
    %v554 = vunpack.c.l.b16 %v148
    %v555 = vunpack.c.h.b16 %v148
    %v556 = vunpack.c.l.b16 %v149
    %v557 = vunpack.c.h.b16 %v149
    %v558 = vunpack.c.l.b16 %v150
    %v559 = vunpack.c.h.b16 %v150
    %v560 = vunpack.c.l.b16 %v151
    %v561 = vunpack.c.h.b16 %v151
    %v562 = vunpack.c.l.b16 %v152
    %v563 = vunpack.c.h.b16 %v152
    %v564 = vunpack.c.l.b16 %v153
    %v565 = vunpack.c.h.b16 %v153
    %v566 = vunpack.c.l.b16 %v154
    %v567 = vunpack.c.h.b16 %v154
    %v568 = vunpack.c.l.b16 %v155
    %v569 = vunpack.c.h.b16 %v155
    %v570 = vunpack.c.l.b16 %v156
    %v571 = vunpack.c.h.b16 %v156
    %v572 = vunpack.c.l.b16 %v157
    %v573 = vunpack.c.h.b16 %v157
    %v574 = vunpack.c.l.b16 %v158
    %v575 = vunpack.c.h.b16 %v158
    %v576 = vunpack.c.l.b16 %v159
    %v577 = vunpack.c.h.b16 %v159
    %v578 = vunpack.c.l.b16 %v160
    %v579 = vunpack.c.h.b16 %v160
    %v580 = vunpack.c.l.b16 %v161
    %v581 = vunpack.c.h.b16 %v161
    %v582 = vunpack.c.l.b16 %v162
    %v583 = vunpack.c.h.b16 %v162
    %v584 = vunpack.c.l.b16 %v163
    %v585 = vunpack.c.h.b16 %v163
    %v586 = vunpack.c.l.b16 %v164
    %v587 = vunpack.c.h.b16 %v164
    %v588 = vunpack.c.l.b16 %v165
    %v589 = vunpack.c.h.b16 %v165
    %v590 = vunpack.c.l.b16 %v166
    %v591 = vunpack.c.h.b16 %v166
    %v592 = vunpack.c.l.b16 %v167
    %v593 = vunpack.c.h.b16 %v167
    %v594 = vunpack.c.l.b16 %v168
    %v595 = vunpack.c.h.b16 %v168
    %v596 = vunpack.c.l.b16 %v169
    %v597 = vunpack.c.h.b16 %v169
    %v598 = vunpack.c.l.b16 %v170
    %v599 = vunpack.c.h.b16 %v170
    %v600 = vunpack.c.l.b16 %v171
    %v601 = vunpack.c.h.b16 %v171
    %v602 = vunpack.c.l.b16 %v172
    %v603 = vunpack.c.h.b16 %v172
    %v604 = vunpack.c.l.b16 %v173
    %v605 = vunpack.c.h.b16 %v173
    %v606 = vunpack.c.l.b16 %v174
    %v607 = vunpack.c.h.b16 %v174
    %v608 = vunpack.c.l.b16 %v175
    %v609 = vunpack.c.h.b16 %v175
    %v610 = vunpack.c.l.b16 %v176
    %v611 = vunpack.c.h.b16 %v176
    %v612 = vunpack.c.l.b16 %v177
    %v613 = vunpack.c.h.b16 %v177
    %v614 = vunpack.c.l.b16 %v178
    %v615 = vunpack.c.h.b16 %v178
    %v616 = vunpack.c.l.b16 %v179
    %v617 = vunpack.c.h.b16 %v179
    %v618 = vunpack.c.l.b16 %v180
    %v619 = vunpack.c.h.b16 %v180
    %v620 = vunpack.c.l.b16 %v181
    %v621 = vunpack.c.h.b16 %v181
    %v622 = vunpack.c.l.b16 %v182
    %v623 = vunpack.c.h.b16 %v182
    %v624 = vunpack.c.l.b16 %v183
    %v625 = vunpack.c.h.b16 %v183
    %v626 = vunpack.c.l.b16 %v184
    %v627 = vunpack.c.h.b16 %v184
    %v628 = vunpack.c.l.b16 %v185
    %v629 = vunpack.c.h.b16 %v185
    %v630 = vunpack.c.l.b16 %v186
    %v631 = vunpack.c.h.b16 %v186
    %v632 = vunpack.c.l.b16 %v187
    %v633 = vunpack.c.h.b16 %v187
    %v634 = vunpack.c.l.b16 %v188
    %v635 = vunpack.c.h.b16 %v188
    %v636 = vunpack.c.l.b16 %v189
    %v637 = vunpack.c.h.b16 %v189
    %v638 = vunpack.c.l.b16 %v190
    %v639 = vunpack.c.h.b16 %v190
    %v640 = vunpack.c.l.b16 %v191
    %v641 = vunpack.c.h.b16 %v191
    %v642 = vunpack.c.l.b16 %v192
    %v643 = vunpack.c.h.b16 %v192
    %v644 = vunpack.c.l.b16 %v193
    %v645 = vunpack.c.h.b16 %v193
    %v646 = vunpack.c.l.b16 %v194
    %v647 = vunpack.c.h.b16 %v194
    %v648 = vunpack.c.l.b16 %v195
    %v649 = vunpack.c.h.b16 %v195
    %v650 = vunpack.c.l.b16 %v196
    %v651 = vunpack.c.h.b16 %v196
    %v652 = vunpack.c.l.b16 %v197
    %v653 = vunpack.c.h.b16 %v197
    %v654 = vunpack.c.l.b16 %v198
    %v655 = vunpack.c.h.b16 %v198
    %v656 = vunpack.c.l.b16 %v199
    %v657 = vunpack.c.h.b16 %v199
    %v658 = vunpack.c.l.b16 %v200
    %v659 = vunpack.c.h.b16 %v200
    %v660 = vunpack.c.l.b16 %v201
    %v661 = vunpack.c.h.b16 %v201
    %v662 = vunpack.c.l.b16 %v202
    %v663 = vunpack.c.h.b16 %v202
    %v664 = vunpack.c.l.b16 %v203
    %v665 = vunpack.c.h.b16 %v203
    %v666 = vunpack.c.l.b16 %v204
    %v667 = vunpack.c.h.b16 %v204
    %v668 = vunpack.c.l.b16 %v205
    %v669 = vunpack.c.h.b16 %v205
    %v670 = vunpack.c.l.b16 %v206
    %v671 = vunpack.c.h.b16 %v206
    %v672 = vunpack.c.l.b16 %v207
    %v673 = vunpack.c.h.b16 %v207
    %v674 = vunpack.c.l.b16 %v208
    %v675 = vunpack.c.h.b16 %v208
    %v676 = vunpack.c.l.b16 %v209
    %v677 = vunpack.c.h.b16 %v209
    %v678 = vunpack.c.l.b16 %v210
    %v679 = vunpack.c.h.b16 %v210
    %v680 = vunpack.c.l.b16 %v211
    %v681 = vunpack.c.h.b16 %v211
    %v682 = vunpack.c.l.b16 %v212
    %v683 = vunpack.c.h.b16 %v212
    %v684 = vunpack.c.l.b16 %v213
    %v685 = vunpack.c.h.b16 %v213
    %v686 = vunpack.c.l.b16 %v214
    %v687 = vunpack.c.h.b16 %v214
    %v688 = vunpack.c.l.b16 %v215
    %v689 = vunpack.c.h.b16 %v215
    %v690 = vunpack.c.l.b16 %v216
    %v691 = vunpack.c.h.b16 %v216
    %v692 = vunpack.c.l.b16 %v217
    %v693 = vunpack.c.h.b16 %v217
    %v694 = vunpack.c.l.b16 %v218
    %v695 = vunpack.c.h.b16 %v218
    %v696 = vunpack.c.l.b16 %v219
    %v697 = vunpack.c.h.b16 %v219
    %v698 = vunpack.c.l.b16 %v220
    %v699 = vunpack.c.h.b16 %v220
    %v700 = vunpack.c.l.b16 %v221
    %v701 = vunpack.c.h.b16 %v221
    %v702 = vunpack.c.l.b16 %v222
    %v703 = vunpack.c.h.b16 %v222
    %v704 = vunpack.c.l.b16 %v223
    %v705 = vunpack.c.h.b16 %v223
    %v706 = vunpack.c.l.b16 %v224
    %v707 = vunpack.c.h.b16 %v224
    %v708 = vunpack.c.l.b16 %v225
    %v709 = vunpack.c.h.b16 %v225
    %v710 = vunpack.c.l.b16 %v226
    %v711 = vunpack.c.h.b16 %v226
    %v712 = vunpack.c.l.b16 %v227
    %v713 = vunpack.c.h.b16 %v227
    %v714 = vunpack.c.l.b16 %v228
    %v715 = vunpack.c.h.b16 %v228
    %v716 = vunpack.c.l.b16 %v229
    %v717 = vunpack.c.h.b16 %v229
    %v718 = vunpack.c.l.b16 %v230
    %v719 = vunpack.c.h.b16 %v230
    %v720 = vunpack.c.l.b16 %v231
    %v721 = vunpack.c.h.b16 %v231
    %v722 = vunpack.c.l.b16 %v232
    %v723 = vunpack.c.h.b16 %v232
    %v724 = vunpack.c.l.b16 %v233
    %v725 = vunpack.c.h.b16 %v233
    %v726 = vunpack.c.l.b16 %v234
    %v727 = vunpack.c.h.b16 %v234
    %v728 = vunpack.c.l.b16 %v235
    %v729 = vunpack.c.h.b16 %v235
    %v730 = vunpack.c.l.b16 %v236
    %v731 = vunpack.c.h.b16 %v236
    %v732 = vunpack.c.l.b16 %v237
    %v733 = vunpack.c.h.b16 %v237
    %v734 = vunpack.c.l.b16 %v238
    %v735 = vunpack.c.h.b16 %v238
    %v736 = vunpack.c.l.b16 %v239
    %v737 = vunpack.c.h.b16 %v239
    %v738 = vunpack.c.l.b16 %v240
    %v739 = vunpack.c.h.b16 %v240
    %v740 = vunpack.c.l.b16 %v241
    %v741 = vunpack.c.h.b16 %v241
    %v742 = vunpack.c.l.b16 %v242
    %v743 = vunpack.c.h.b16 %v242
    %v744 = vunpack.c.l.b16 %v243
    %v745 = vunpack.c.h.b16 %v243
    %v746 = vunpack.c.l.b16 %v244
    %v747 = vunpack.c.h.b16 %v244
    %v748 = vunpack.c.l.b16 %v245
    %v749 = vunpack.c.h.b16 %v245
    %v750 = vunpack.c.l.b16 %v246
    %v751 = vunpack.c.h.b16 %v246
    %v752 = vunpack.c.l.b16 %v247
    %v753 = vunpack.c.h.b16 %v247
    %v754 = vunpack.c.l.b16 %v248
    %v755 = vunpack.c.h.b16 %v248
    %v756 = vunpack.c.l.b16 %v249
    %v757 = vunpack.c.h.b16 %v249
    %v758 = vunpack.c.l.b16 %v250
    %v759 = vunpack.c.h.b16 %v250
    %v760 = vunpack.c.l.b16 %v251
    %v761 = vunpack.c.h.b16 %v251
    %v762 = vunpack.c.l.b16 %v252
    %v763 = vunpack.c.h.b16 %v252
    %v764 = vunpack.c.l.b16 %v253
    %v765 = vunpack.c.h.b16 %v253
    %v766 = vunpack.c.l.b16 %v254
    %v767 = vunpack.c.h.b16 %v254
    %v768 = vunpack.c.l.b16 %v255
    %v769 = vunpack.c.h.b16 %v255
    %v770 = vunpack.c.l.b16 %v256
    %v771 = vunpack.c.h.b16 %v256
    %v772 = vunpack.c.l.b16 %v257
    %v773 = vunpack.c.h.b16 %v257
    %v774 = vunpack.c.l.b16 %v258
    %v775 = vunpack.c.h.b16 %v258
    %v776 = vunpack.c.l.b16 %v259
    %v777 = vunpack.c.h.b16 %v259
    %v778 = vunpack.c.l.b16 %v260
    %v779 = vunpack.c.h.b16 %v260
    %v780 = vunpack.c.l.b16 %v261
    %v781 = vunpack.c.h.b16 %v261
    %v782 = vunpack.c.l.b16 %v262
    %v783 = vunpack.c.h.b16 %v262
    %v784 = vunpack.c.l.b16 %v263
    %v785 = vunpack.c.h.b16 %v263
    %v786 = vunpack.c.l.b16 %v264
    %v787 = vunpack.c.h.b16 %v264
    %v788 = vunpack.c.l.b16 %v265
    %v789 = vunpack.c.h.b16 %v265
    %v790 = vunpack.c.l.b16 %v266
    %v791 = vunpack.c.h.b16 %v266
    %v792 = vunpack.c.l.b16 %v267
    %v793 = vunpack.c.h.b16 %v267
    %v794 = vunpack.c.l.b16 %v268
    %v795 = vunpack.c.h.b16 %v268
    %v796 = vunpack.c.l.b16 %v269
    %v797 = vunpack.c.h.b16 %v269
    %v798 = vunpack.c.l.b16 %v270
    %v799 = vunpack.c.h.b16 %v270
    %v800 = vunpack.c.l.b16 %v271
    %v801 = vunpack.c.h.b16 %v271
    %v802 = vunpack.c.l.b16 %v272
    %v803 = vunpack.c.h.b16 %v272
    %v804 = vunpack.c.l.b16 %v273
    %v805 = vunpack.c.h.b16 %v273
    %v806 = vunpack.c.l.b16 %v274
    %v807 = vunpack.c.h.b16 %v274
    %v808 = vunpack.c.l.b16 %v275
    %v809 = vunpack.c.h.b16 %v275
    %v810 = vunpack.c.l.b16 %v276
    %v811 = vunpack.c.h.b16 %v276
    %v812 = vunpack.c.l.b16 %v277
    %v813 = vunpack.c.h.b16 %v277
    %v814 = vunpack.c.l.b16 %v278
    %v815 = vunpack.c.h.b16 %v278
    %v816 = vunpack.c.l.b16 %v279
    %v817 = vunpack.c.h.b16 %v279
    %v818 = vunpack.c.l.b16 %v280
    %v819 = vunpack.c.h.b16 %v280
    %v820 = vunpack.c.l.b16 %v281
    %v821 = vunpack.c.h.b16 %v281
    %v822 = vunpack.c.l.b16 %v282
    %v823 = vunpack.c.h.b16 %v282
    %v824 = vunpack.c.l.b16 %v283
    %v825 = vunpack.c.h.b16 %v283
    %v826 = vunpack.c.l.b16 %v284
    %v827 = vunpack.c.h.b16 %v284
    %v828 = vunpack.c.l.b16 %v285
    %v829 = vunpack.c.h.b16 %v285
    %v830 = vunpack.c.l.b16 %v286
    %v831 = vunpack.c.h.b16 %v286
    %v832 = vunpack.c.l.b16 %v287
    %v833 = vunpack.c.h.b16 %v287
    %v834 = vunpack.c.l.b16 %v288
    %v835 = vunpack.c.h.b16 %v288
    %v836 = vunpack.c.l.b16 %v289
    %v837 = vunpack.c.h.b16 %v289
    %v838 = vunpack.c.l.b16 %v290
    %v839 = vunpack.c.h.b16 %v290
    %v840 = vunpack.c.l.b16 %v291
    %v841 = vunpack.c.h.b16 %v291
    %v842 = vunpack.c.l.b16 %v292
    %v843 = vunpack.c.h.b16 %v292
    %v844 = vunpack.c.l.b16 %v293
    %v845 = vunpack.c.h.b16 %v293
    %v846 = vunpack.c.l.b16 %v294
    %v847 = vunpack.c.h.b16 %v294
    %v848 = vunpack.c.l.b16 %v295
    %v849 = vunpack.c.h.b16 %v295
    %v850 = vunpack.c.l.b16 %v296
    %v851 = vunpack.c.h.b16 %v296
    %v852 = vunpack.c.l.b16 %v297
    %v853 = vunpack.c.h.b16 %v297
    %v854 = vunpack.c.l.b16 %v298
    %v855 = vunpack.c.h.b16 %v298
    %v856 = vunpack.c.l.b16 %v299
    %v857 = vunpack.c.h.b16 %v299
    %v858 = vunpack.c.l.b16 %v300
    %v859 = vunpack.c.h.b16 %v300
    %v860 = vunpack.c.l.b16 %v301
    %v861 = vunpack.c.h.b16 %v301
    %v862 = vunpack.c.l.b16 %v302
    %v863 = vunpack.c.h.b16 %v302
    %v864 = vunpack.c.l.b16 %v303
    %v865 = vunpack.c.h.b16 %v303
    %v866 = vunpack.c.l.b16 %v304
    %v867 = vunpack.c.h.b16 %v304
    %v868 = vunpack.c.l.b16 %v305
    %v869 = vunpack.c.h.b16 %v305
    %v870 = vunpack.c.l.b16 %v306
    %v871 = vunpack.c.h.b16 %v306
    %v872 = vunpack.c.l.b16 %v307
    %v873 = vunpack.c.h.b16 %v307
    %v874 = vunpack.c.l.b16 %v308
    %v875 = vunpack.c.h.b16 %v308
    %v876 = vunpack.c.l.b16 %v309
    %v877 = vunpack.c.h.b16 %v309
    %v878 = vunpack.c.l.b16 %v310
    %v879 = vunpack.c.h.b16 %v310
    %v880 = vunpack.c.l.b16 %v311
    %v881 = vunpack.c.h.b16 %v311
    %v882 = vunpack.c.l.b16 %v312
    %v883 = vunpack.c.h.b16 %v312
    %v884 = vunpack.c.l.b16 %v313
    %v885 = vunpack.c.h.b16 %v313
    %v886 = vunpack.c.l.b16 %v314
    %v887 = vunpack.c.h.b16 %v314
    %v888 = vunpack.c.l.b16 %v315
    %v889 = vunpack.c.h.b16 %v315
    %v890 = vunpack.c.l.b16 %v316
    %v891 = vunpack.c.h.b16 %v316
    %v892 = vunpack.c.l.b16 %v317
    %v893 = vunpack.c.h.b16 %v317
    %v894 = vunpack.c.l.b16 %v318
    %v895 = vunpack.c.h.b16 %v318
    %v896 = vunpack.c.l.b16 %v319
    %v897 = vunpack.c.h.b16 %v319
    %v898 = vunpack.c.l.b16 %v320
    %v899 = vunpack.c.h.b16 %v320
    %v900 = vunpack.c.l.b16 %v321
    %v901 = vunpack.c.h.b16 %v321
    %v902 = vunpack.c.l.b16 %v322
    %v903 = vunpack.c.h.b16 %v322
    %v904 = vunpack.c.l.b16 %v323
    %v905 = vunpack.c.h.b16 %v323
    %v906 = vunpack.c.l.b16 %v324
    %v907 = vunpack.c.h.b16 %v324
    %v908 = vunpack.c.l.b16 %v325
    %v909 = vunpack.c.h.b16 %v325
    %v910 = vunpack.c.l.b16 %v326
    %v911 = vunpack.c.h.b16 %v326
    %v912 = vunpack.c.l.b16 %v327
    %v913 = vunpack.c.h.b16 %v327
    %v914 = vunpack.c.l.b16 %v328
    %v915 = vunpack.c.h.b16 %v328
    %v916 = vunpack.c.l.b16 %v329
    %v917 = vunpack.c.h.b16 %v329
    %v918 = vunpack.c.l.b16 %v330
    %v919 = vunpack.c.h.b16 %v330
    %v920 = vunpack.c.l.b16 %v331
    %v921 = vunpack.c.h.b16 %v331
    %v922 = vunpack.c.l.b16 %v332
    %v923 = vunpack.c.h.b16 %v332
    %v924 = vunpack.c.l.b16 %v333
    %v925 = vunpack.c.h.b16 %v333
    %v926 = vunpack.c.l.b16 %v334
    %v927 = vunpack.c.h.b16 %v334
    %v928 = vunpack.c.l.b16 %v335
    %v929 = vunpack.c.h.b16 %v335
    %v930 = vunpack.c.l.b16 %v336
    %v931 = vunpack.c.h.b16 %v336
    %v932 = vunpack.c.l.b16 %v337
    %v933 = vunpack.c.h.b16 %v337
    %v934 = vunpack.c.l.b16 %v338
    %v935 = vunpack.c.h.b16 %v338
    %v936 = vunpack.c.l.b16 %v339
    %v937 = vunpack.c.h.b16 %v339
    %v938 = vpack.c.b16 %v550, %v546
    %v939 = vpack.c.b16 %v551, %v547
    %v940 = vpack.c.b16 %v552, %v548
    %v941 = vpack.c.b16 %v553, %v549
    %v942 = vpack.c.b16 %v558, %v554
    %v943 = vpack.c.b16 %v559, %v555
    %v944 = vpack.c.b16 %v560, %v556
    %v945 = vpack.c.b16 %v561, %v557
    %v946 = vpack.c.b16 %v566, %v562
    %v947 = vpack.c.b16 %v567, %v563
    %v948 = vpack.c.b16 %v568, %v564
    %v949 = vpack.c.b16 %v569, %v565
    %v950 = vpack.c.b16 %v574, %v570
    %v951 = vpack.c.b16 %v575, %v571
    %v952 = vpack.c.b16 %v576, %v572
    %v953 = vpack.c.b16 %v577, %v573
    %v954 = vpack.c.b16 %v582, %v578
    %v955 = vpack.c.b16 %v583, %v579
    %v956 = vpack.c.b16 %v584, %v580
    %v957 = vpack.c.b16 %v585, %v581
    %v958 = vpack.c.b16 %v590, %v586
    %v959 = vpack.c.b16 %v591, %v587
    %v960 = vpack.c.b16 %v592, %v588
    %v961 = vpack.c.b16 %v593, %v589
    %v962 = vpack.c.b16 %v598, %v594
    %v963 = vpack.c.b16 %v599, %v595
    %v964 = vpack.c.b16 %v600, %v596
    %v965 = vpack.c.b16 %v601, %v597
    %v966 = vpack.c.b16 %v606, %v602
    %v967 = vpack.c.b16 %v607, %v603
    %v968 = vpack.c.b16 %v608, %v604
    %v969 = vpack.c.b16 %v609, %v605
    %v970 = vpack.c.b16 %v614, %v610
    %v971 = vpack.c.b16 %v615, %v611
    %v972 = vpack.c.b16 %v616, %v612
    %v973 = vpack.c.b16 %v617, %v613
    %v974 = vpack.c.b16 %v622, %v618
    %v975 = vpack.c.b16 %v623, %v619
    %v976 = vpack.c.b16 %v624, %v620
    %v977 = vpack.c.b16 %v625, %v621
    %v978 = vpack.c.b16 %v630, %v626
    %v979 = vpack.c.b16 %v631, %v627
    %v980 = vpack.c.b16 %v632, %v628
    %v981 = vpack.c.b16 %v633, %v629
    %v982 = vpack.c.b16 %v638, %v634
    %v983 = vpack.c.b16 %v639, %v635
    %v984 = vpack.c.b16 %v640, %v636
    %v985 = vpack.c.b16 %v641, %v637
    %v986 = vpack.c.b16 %v646, %v642
    %v987 = vpack.c.b16 %v647, %v643
    %v988 = vpack.c.b16 %v648, %v644
    %v989 = vpack.c.b16 %v649, %v645
    %v990 = vpack.c.b16 %v654, %v650
    %v991 = vpack.c.b16 %v655, %v651
    %v992 = vpack.c.b16 %v656, %v652
    %v993 = vpack.c.b16 %v657, %v653
    %v994 = vpack.c.b16 %v662, %v658
    %v995 = vpack.c.b16 %v663, %v659
    %v996 = vpack.c.b16 %v664, %v660
    %v997 = vpack.c.b16 %v665, %v661
    %v998 = vpack.c.b16 %v670, %v666
    %v999 = vpack.c.b16 %v671, %v667
    %v1000 = vpack.c.b16 %v672, %v668
    %v1001 = vpack.c.b16 %v673, %v669
    %v1002 = vpack.c.b16 %v678, %v674
    %v1003 = vpack.c.b16 %v679, %v675
    %v1004 = vpack.c.b16 %v680, %v676
    %v1005 = vpack.c.b16 %v681, %v677
    %v1006 = vpack.c.b16 %v686, %v682
    %v1007 = vpack.c.b16 %v687, %v683
    %v1008 = vpack.c.b16 %v688, %v684
    %v1009 = vpack.c.b16 %v689, %v685
    %v1010 = vpack.c.b16 %v694, %v690
    %v1011 = vpack.c.b16 %v695, %v691
    %v1012 = vpack.c.b16 %v696, %v692
    %v1013 = vpack.c.b16 %v697, %v693
    %v1014 = vpack.c.b16 %v702, %v698
    %v1015 = vpack.c.b16 %v703, %v699
    %v1016 = vpack.c.b16 %v704, %v700
    %v1017 = vpack.c.b16 %v705, %v701
    %v1018 = vpack.c.b16 %v710, %v706
    %v1019 = vpack.c.b16 %v711, %v707
    %v1020 = vpack.c.b16 %v712, %v708
    %v1021 = vpack.c.b16 %v713, %v709
    %v1022 = vpack.c.b16 %v718, %v714
    %v1023 = vpack.c.b16 %v719, %v715
    %v1024 = vpack.c.b16 %v720, %v716
    %v1025 = vpack.c.b16 %v721, %v717
    %v1026 = vpack.c.b16 %v726, %v722
    %v1027 = vpack.c.b16 %v727, %v723
    %v1028 = vpack.c.b16 %v728, %v724
    %v1029 = vpack.c.b16 %v729, %v725
    %v1030 = vpack.c.b16 %v734, %v730
    %v1031 = vpack.c.b16 %v735, %v731
    %v1032 = vpack.c.b16 %v736, %v732
    %v1033 = vpack.c.b16 %v737, %v733
    %v1034 = vpack.c.b16 %v742, %v738
    %v1035 = vpack.c.b16 %v743, %v739
    %v1036 = vpack.c.b16 %v744, %v740
    %v1037 = vpack.c.b16 %v745, %v741
    %v1038 = vpack.c.b16 %v750, %v746
    %v1039 = vpack.c.b16 %v751, %v747
    %v1040 = vpack.c.b16 %v752, %v748
    %v1041 = vpack.c.b16 %v753, %v749
    %v1042 = vpack.c.b16 %v758, %v754
    %v1043 = vpack.c.b16 %v759, %v755
    %v1044 = vpack.c.b16 %v760, %v756
    %v1045 = vpack.c.b16 %v761, %v757
    %v1046 = vpack.c.b16 %v766, %v762
    %v1047 = vpack.c.b16 %v767, %v763
    %v1048 = vpack.c.b16 %v768, %v764
    %v1049 = vpack.c.b16 %v769, %v765
    %v1050 = vpack.c.b16 %v774, %v770
    %v1051 = vpack.c.b16 %v775, %v771
    %v1052 = vpack.c.b16 %v776, %v772
    %v1053 = vpack.c.b16 %v777, %v773
    %v1054 = vpack.c.b16 %v782, %v778
    %v1055 = vpack.c.b16 %v783, %v779
    %v1056 = vpack.c.b16 %v784, %v780
    %v1057 = vpack.c.b16 %v785, %v781
    %v1058 = vpack.c.b16 %v790, %v786
    %v1059 = vpack.c.b16 %v791, %v787
    %v1060 = vpack.c.b16 %v792, %v788
    %v1061 = vpack.c.b16 %v793, %v789
    %v1062 = vpack.c.b16 %v798, %v794
    %v1063 = vpack.c.b16 %v799, %v795
    %v1064 = vpack.c.b16 %v800, %v796
    %v1065 = vpack.c.b16 %v801, %v797
    %v1066 = vpack.c.b16 %v806, %v802
    %v1067 = vpack.c.b16 %v807, %v803
    %v1068 = vpack.c.b16 %v808, %v804
    %v1069 = vpack.c.b16 %v809, %v805
    %v1070 = vpack.c.b16 %v814, %v810
    %v1071 = vpack.c.b16 %v815, %v811
    %v1072 = vpack.c.b16 %v816, %v812
    %v1073 = vpack.c.b16 %v817, %v813
    %v1074 = vpack.c.b16 %v822, %v818
    %v1075 = vpack.c.b16 %v823, %v819
    %v1076 = vpack.c.b16 %v824, %v820
    %v1077 = vpack.c.b16 %v825, %v821
    %v1078 = vpack.c.b16 %v830, %v826
    %v1079 = vpack.c.b16 %v831, %v827
    %v1080 = vpack.c.b16 %v832, %v828
    %v1081 = vpack.c.b16 %v833, %v829
    %v1082 = vpack.c.b16 %v838, %v834
    %v1083 = vpack.c.b16 %v839, %v835
    %v1084 = vpack.c.b16 %v840, %v836
    %v1085 = vpack.c.b16 %v841, %v837
    %v1086 = vpack.c.b16 %v846, %v842
    %v1087 = vpack.c.b16 %v847, %v843
    %v1088 = vpack.c.b16 %v848, %v844
    %v1089 = vpack.c.b16 %v849, %v845
    %v1090 = vpack.c.b16 %v854, %v850
    %v1091 = vpack.c.b16 %v855, %v851
    %v1092 = vpack.c.b16 %v856, %v852
    %v1093 = vpack.c.b16 %v857, %v853
    %v1094 = vpack.c.b16 %v862, %v858
    %v1095 = vpack.c.b16 %v863, %v859
    %v1096 = vpack.c.b16 %v864, %v860
    %v1097 = vpack.c.b16 %v865, %v861
    %v1098 = vpack.c.b16 %v870, %v866
    %v1099 = vpack.c.b16 %v871, %v867
    %v1100 = vpack.c.b16 %v872, %v868
    %v1101 = vpack.c.b16 %v873, %v869
    %v1102 = vpack.c.b16 %v878, %v874
    %v1103 = vpack.c.b16 %v879, %v875
    %v1104 = vpack.c.b16 %v880, %v876
    %v1105 = vpack.c.b16 %v881, %v877
    %v1106 = vpack.c.b16 %v886, %v882
    %v1107 = vpack.c.b16 %v887, %v883
    %v1108 = vpack.c.b16 %v888, %v884
    %v1109 = vpack.c.b16 %v889, %v885
    %v1110 = vpack.c.b16 %v894, %v890
    %v1111 = vpack.c.b16 %v895, %v891
    %v1112 = vpack.c.b16 %v896, %v892
    %v1113 = vpack.c.b16 %v897, %v893
    %v1114 = vpack.c.b16 %v902, %v898
    %v1115 = vpack.c.b16 %v903, %v899
    %v1116 = vpack.c.b16 %v904, %v900
    %v1117 = vpack.c.b16 %v905, %v901
    %v1118 = vpack.c.b16 %v910, %v906
    %v1119 = vpack.c.b16 %v911, %v907
    %v1120 = vpack.c.b16 %v912, %v908
    %v1121 = vpack.c.b16 %v913, %v909
    %v1122 = vpack.c.b16 %v918, %v914
    %v1123 = vpack.c.b16 %v919, %v915
    %v1124 = vpack.c.b16 %v920, %v916
    %v1125 = vpack.c.b16 %v921, %v917
    %v1126 = vpack.c.b16 %v926, %v922
    %v1127 = vpack.c.b16 %v927, %v923
    %v1128 = vpack.c.b16 %v928, %v924
    %v1129 = vpack.c.b16 %v929, %v925
    %v1130 = vpack.c.b16 %v934, %v930
    %v1131 = vpack.c.b16 %v935, %v931
    %v1132 = vpack.c.b16 %v936, %v932
    %v1133 = vpack.c.b16 %v937, %v933
    %vm1330 = vcmask 130048
    %v1332 = vsel %vm1330, %v143, 0
    %1334 = vmatpush.bf16.msra.mxu0 %v966
    %1335 = vmatpush.bf16.msra.mxu0 %v962
    %1336 = vmatpush.bf16.msra.mxu0 %v958
    %1337 = vmatpush.bf16.msra.mxu0 %v954
    %1338 = vmatpush.bf16.msra.mxu0 %v950
    %1339 = vmatpush.bf16.msra.mxu0 %v946
    %1340 = vmatpush.bf16.msra.mxu0 %v942
    %1341 = vmatpush.bf16.msra.mxu0 %v938
    %1342 = vmatmul.bf16.gmra.mxu0 %v137
    %v1343 = vpop.f32.mrf.mxu0
    %v1344 = vadd.f32 %v342, %v1343
    %v1345 = vpop.f32.mrf.mxu0
    %1346 = vdwg.mxu0
    %1347 = vmatpush.bf16.msra.mxu0 %v998
    %1348 = vmatpush.bf16.msra.mxu0 %v994
    %1349 = vmatpush.bf16.msra.mxu0 %v990
    %1350 = vmatpush.bf16.msra.mxu0 %v986
    %1351 = vmatpush.bf16.msra.mxu0 %v982
    %1352 = vmatpush.bf16.msra.mxu0 %v978
    %1353 = vmatpush.bf16.msra.mxu0 %v974
    %1354 = vmatpush.bf16.msra.mxu0 %v970
    %1355 = vmatmul.bf16.gmra.mxu0 %v138
    %v1356 = vpop.f32.mrf.mxu0
    %v1357 = vadd.f32 %v1344, %v1356
    %v1358 = vpop.f32.mrf.mxu0
    %1359 = vdwg.mxu0
    %1360 = vmatpush.bf16.msra.mxu0 %v1030
    %1361 = vmatpush.bf16.msra.mxu0 %v1026
    %1362 = vmatpush.bf16.msra.mxu0 %v1022
    %1363 = vmatpush.bf16.msra.mxu0 %v1018
    %1364 = vmatpush.bf16.msra.mxu0 %v1014
    %1365 = vmatpush.bf16.msra.mxu0 %v1010
    %1366 = vmatpush.bf16.msra.mxu0 %v1006
    %1367 = vmatpush.bf16.msra.mxu0 %v1002
    %1368 = vmatmul.bf16.gmra.mxu0 %v139
    %v1369 = vpop.f32.mrf.mxu0
    %v1370 = vadd.f32 %v1357, %v1369
    %v1371 = vpop.f32.mrf.mxu0
    %1372 = vdwg.mxu0
    %1373 = vmatpush.bf16.msra.mxu0 %v1062
    %1374 = vmatpush.bf16.msra.mxu0 %v1058
    %1375 = vmatpush.bf16.msra.mxu0 %v1054
    %1376 = vmatpush.bf16.msra.mxu0 %v1050
    %1377 = vmatpush.bf16.msra.mxu0 %v1046
    %1378 = vmatpush.bf16.msra.mxu0 %v1042
    %1379 = vmatpush.bf16.msra.mxu0 %v1038
    %1380 = vmatpush.bf16.msra.mxu0 %v1034
    %1381 = vmatmul.bf16.gmra.mxu0 %v140
    %v1382 = vpop.f32.mrf.mxu0
    %v1383 = vadd.f32 %v1370, %v1382
    %v1384 = vpop.f32.mrf.mxu0
    %1385 = vdwg.mxu0
    %1386 = vmatpush.bf16.msra.mxu0 %v1094
    %1387 = vmatpush.bf16.msra.mxu0 %v1090
    %1388 = vmatpush.bf16.msra.mxu0 %v1086
    %1389 = vmatpush.bf16.msra.mxu0 %v1082
    %1390 = vmatpush.bf16.msra.mxu0 %v1078
    %1391 = vmatpush.bf16.msra.mxu0 %v1074
    %1392 = vmatpush.bf16.msra.mxu0 %v1070
    %1393 = vmatpush.bf16.msra.mxu0 %v1066
    %1394 = vmatmul.bf16.gmra.mxu0 %v141
    %v1395 = vpop.f32.mrf.mxu0
    %v1396 = vadd.f32 %v1383, %v1395
    %v1397 = vpop.f32.mrf.mxu0
    %1398 = vdwg.mxu0
    %1399 = vmatpush.bf16.msra.mxu0 %v1126
    %1400 = vmatpush.bf16.msra.mxu0 %v1122
    %1401 = vmatpush.bf16.msra.mxu0 %v1118
    %1402 = vmatpush.bf16.msra.mxu0 %v1114
    %1403 = vmatpush.bf16.msra.mxu0 %v1110
    %1404 = vmatpush.bf16.msra.mxu0 %v1106
    %1405 = vmatpush.bf16.msra.mxu0 %v1102
    %1406 = vmatpush.bf16.msra.mxu0 %v1098
    %1407 = vmatmul.bf16.gmra.mxu0 %v142
    %v1408 = vpop.f32.mrf.mxu0
    %v1409 = vadd.f32 %v1396, %v1408
    %v1410 = vpop.f32.mrf.mxu0
    %1411 = vdwg.mxu0
    %1412 = vmatpush.bf16.msra.mxu0 0
    %1413 = vmatpush.bf16.msra.mxu0 0
    %1414 = vmatpush.bf16.msra.mxu0 0
    %1415 = vmatpush.bf16.msra.mxu0 0
    %1416 = vmatpush.bf16.msra.mxu0 0
    %1417 = vmatpush.bf16.msra.mxu0 0
    %1418 = vmatpush.bf16.msra.mxu0 0
    %1419 = vmatpush.bf16.msra.mxu0 %v1130
    %1420 = vmatmul.bf16.gmra.mxu0 %v1332
    %v1421 = vpop.f32.mrf.mxu0
    %v1422 = vadd.f32 %v1409, %v1421
    %v1423 = vpop.f32.mrf.mxu0
    %1424 = vdwg.mxu0
    %1425 = vmatpush.bf16.msra.mxu0 %v967
    %1426 = vmatpush.bf16.msra.mxu0 %v963
    %1427 = vmatpush.bf16.msra.mxu0 %v959
    %1428 = vmatpush.bf16.msra.mxu0 %v955
    %1429 = vmatpush.bf16.msra.mxu0 %v951
    %1430 = vmatpush.bf16.msra.mxu0 %v947
    %1431 = vmatpush.bf16.msra.mxu0 %v943
    %1432 = vmatpush.bf16.msra.mxu0 %v939
    %1433 = vmatmul.bf16.gmra.mxu0 %v137
    %v1434 = vpop.f32.mrf.mxu0
    %v1435 = vadd.f32 %v343, %v1434
    %v1436 = vpop.f32.mrf.mxu0
    %1437 = vdwg.mxu0
    %1438 = vmatpush.bf16.msra.mxu0 %v999
    %1439 = vmatpush.bf16.msra.mxu0 %v995
    %1440 = vmatpush.bf16.msra.mxu0 %v991
    %1441 = vmatpush.bf16.msra.mxu0 %v987
    %1442 = vmatpush.bf16.msra.mxu0 %v983
    %1443 = vmatpush.bf16.msra.mxu0 %v979
    %1444 = vmatpush.bf16.msra.mxu0 %v975
    %1445 = vmatpush.bf16.msra.mxu0 %v971
    %1446 = vmatmul.bf16.gmra.mxu0 %v138
    %v1447 = vpop.f32.mrf.mxu0
    %v1448 = vadd.f32 %v1435, %v1447
    %v1449 = vpop.f32.mrf.mxu0
    %1450 = vdwg.mxu0
    %1451 = vmatpush.bf16.msra.mxu0 %v1031
    %1452 = vmatpush.bf16.msra.mxu0 %v1027
    %1453 = vmatpush.bf16.msra.mxu0 %v1023
    %1454 = vmatpush.bf16.msra.mxu0 %v1019
    %1455 = vmatpush.bf16.msra.mxu0 %v1015
    %1456 = vmatpush.bf16.msra.mxu0 %v1011
    %1457 = vmatpush.bf16.msra.mxu0 %v1007
    %1458 = vmatpush.bf16.msra.mxu0 %v1003
    %1459 = vmatmul.bf16.gmra.mxu0 %v139
    %v1460 = vpop.f32.mrf.mxu0
    %v1461 = vadd.f32 %v1448, %v1460
    %v1462 = vpop.f32.mrf.mxu0
    %1463 = vdwg.mxu0
    %1464 = vmatpush.bf16.msra.mxu0 %v1063
    %1465 = vmatpush.bf16.msra.mxu0 %v1059
    %1466 = vmatpush.bf16.msra.mxu0 %v1055
    %1467 = vmatpush.bf16.msra.mxu0 %v1051
    %1468 = vmatpush.bf16.msra.mxu0 %v1047
    %1469 = vmatpush.bf16.msra.mxu0 %v1043
    %1470 = vmatpush.bf16.msra.mxu0 %v1039
    %1471 = vmatpush.bf16.msra.mxu0 %v1035
    %1472 = vmatmul.bf16.gmra.mxu0 %v140
    %v1473 = vpop.f32.mrf.mxu0
    %v1474 = vadd.f32 %v1461, %v1473
    %v1475 = vpop.f32.mrf.mxu0
    %1476 = vdwg.mxu0
    %1477 = vmatpush.bf16.msra.mxu0 %v1095
    %1478 = vmatpush.bf16.msra.mxu0 %v1091
    %1479 = vmatpush.bf16.msra.mxu0 %v1087
    %1480 = vmatpush.bf16.msra.mxu0 %v1083
    %1481 = vmatpush.bf16.msra.mxu0 %v1079
    %1482 = vmatpush.bf16.msra.mxu0 %v1075
    %1483 = vmatpush.bf16.msra.mxu0 %v1071
    %1484 = vmatpush.bf16.msra.mxu0 %v1067
    %1485 = vmatmul.bf16.gmra.mxu0 %v141
    %v1486 = vpop.f32.mrf.mxu0
    %v1487 = vadd.f32 %v1474, %v1486
    %v1488 = vpop.f32.mrf.mxu0
    %1489 = vdwg.mxu0
    %1490 = vmatpush.bf16.msra.mxu0 %v1127
    %1491 = vmatpush.bf16.msra.mxu0 %v1123
    %1492 = vmatpush.bf16.msra.mxu0 %v1119
    %1493 = vmatpush.bf16.msra.mxu0 %v1115
    %1494 = vmatpush.bf16.msra.mxu0 %v1111
    %1495 = vmatpush.bf16.msra.mxu0 %v1107
    %1496 = vmatpush.bf16.msra.mxu0 %v1103
    %1497 = vmatpush.bf16.msra.mxu0 %v1099
    %1498 = vmatmul.bf16.gmra.mxu0 %v142
    %v1499 = vpop.f32.mrf.mxu0
    %v1500 = vadd.f32 %v1487, %v1499
    %v1501 = vpop.f32.mrf.mxu0
    %1502 = vdwg.mxu0
    %1503 = vmatpush.bf16.msra.mxu0 0
    %1504 = vmatpush.bf16.msra.mxu0 0
    %1505 = vmatpush.bf16.msra.mxu0 0
    %1506 = vmatpush.bf16.msra.mxu0 0
    %1507 = vmatpush.bf16.msra.mxu0 0
    %1508 = vmatpush.bf16.msra.mxu0 0
    %1509 = vmatpush.bf16.msra.mxu0 0
    %1510 = vmatpush.bf16.msra.mxu0 %v1131
    %1511 = vmatmul.bf16.gmra.mxu0 %v1332
    %v1512 = vpop.f32.mrf.mxu0
    %v1513 = vadd.f32 %v1500, %v1512
    %v1514 = vpop.f32.mrf.mxu0
    %1515 = vdwg.mxu0
    %1516 = vmatpush.bf16.msra.mxu0 %v968
    %1517 = vmatpush.bf16.msra.mxu0 %v964
    %1518 = vmatpush.bf16.msra.mxu0 %v960
    %1519 = vmatpush.bf16.msra.mxu0 %v956
    %1520 = vmatpush.bf16.msra.mxu0 %v952
    %1521 = vmatpush.bf16.msra.mxu0 %v948
    %1522 = vmatpush.bf16.msra.mxu0 %v944
    %1523 = vmatpush.bf16.msra.mxu0 %v940
    %1524 = vmatmul.bf16.gmra.mxu0 %v137
    %v1525 = vpop.f32.mrf.mxu0
    %v1526 = vadd.f32 %v344, %v1525
    %v1527 = vpop.f32.mrf.mxu0
    %1528 = vdwg.mxu0
    %1529 = vmatpush.bf16.msra.mxu0 %v1000
    %1530 = vmatpush.bf16.msra.mxu0 %v996
    %1531 = vmatpush.bf16.msra.mxu0 %v992
    %1532 = vmatpush.bf16.msra.mxu0 %v988
    %1533 = vmatpush.bf16.msra.mxu0 %v984
    %1534 = vmatpush.bf16.msra.mxu0 %v980
    %1535 = vmatpush.bf16.msra.mxu0 %v976
    %1536 = vmatpush.bf16.msra.mxu0 %v972
    %1537 = vmatmul.bf16.gmra.mxu0 %v138
    %v1538 = vpop.f32.mrf.mxu0
    %v1539 = vadd.f32 %v1526, %v1538
    %v1540 = vpop.f32.mrf.mxu0
    %1541 = vdwg.mxu0
    %1542 = vmatpush.bf16.msra.mxu0 %v1032
    %1543 = vmatpush.bf16.msra.mxu0 %v1028
    %1544 = vmatpush.bf16.msra.mxu0 %v1024
    %1545 = vmatpush.bf16.msra.mxu0 %v1020
    %1546 = vmatpush.bf16.msra.mxu0 %v1016
    %1547 = vmatpush.bf16.msra.mxu0 %v1012
    %1548 = vmatpush.bf16.msra.mxu0 %v1008
    %1549 = vmatpush.bf16.msra.mxu0 %v1004
    %1550 = vmatmul.bf16.gmra.mxu0 %v139
    %v1551 = vpop.f32.mrf.mxu0
    %v1552 = vadd.f32 %v1539, %v1551
    %v1553 = vpop.f32.mrf.mxu0
    %1554 = vdwg.mxu0
    %1555 = vmatpush.bf16.msra.mxu0 %v1064
    %1556 = vmatpush.bf16.msra.mxu0 %v1060
    %1557 = vmatpush.bf16.msra.mxu0 %v1056
    %1558 = vmatpush.bf16.msra.mxu0 %v1052
    %1559 = vmatpush.bf16.msra.mxu0 %v1048
    %1560 = vmatpush.bf16.msra.mxu0 %v1044
    %1561 = vmatpush.bf16.msra.mxu0 %v1040
    %1562 = vmatpush.bf16.msra.mxu0 %v1036
    %1563 = vmatmul.bf16.gmra.mxu0 %v140
    %v1564 = vpop.f32.mrf.mxu0
    %v1565 = vadd.f32 %v1552, %v1564
    %v1566 = vpop.f32.mrf.mxu0
    %1567 = vdwg.mxu0
    %1568 = vmatpush.bf16.msra.mxu0 %v1096
    %1569 = vmatpush.bf16.msra.mxu0 %v1092
    %1570 = vmatpush.bf16.msra.mxu0 %v1088
    %1571 = vmatpush.bf16.msra.mxu0 %v1084
    %1572 = vmatpush.bf16.msra.mxu0 %v1080
    %1573 = vmatpush.bf16.msra.mxu0 %v1076
    %1574 = vmatpush.bf16.msra.mxu0 %v1072
    %1575 = vmatpush.bf16.msra.mxu0 %v1068
    %1576 = vmatmul.bf16.gmra.mxu0 %v141
    %v1577 = vpop.f32.mrf.mxu0
    %v1578 = vadd.f32 %v1565, %v1577
    %v1579 = vpop.f32.mrf.mxu0
    %1580 = vdwg.mxu0
    %1581 = vmatpush.bf16.msra.mxu0 %v1128
    %1582 = vmatpush.bf16.msra.mxu0 %v1124
    %1583 = vmatpush.bf16.msra.mxu0 %v1120
    %1584 = vmatpush.bf16.msra.mxu0 %v1116
    %1585 = vmatpush.bf16.msra.mxu0 %v1112
    %1586 = vmatpush.bf16.msra.mxu0 %v1108
    %1587 = vmatpush.bf16.msra.mxu0 %v1104
    %1588 = vmatpush.bf16.msra.mxu0 %v1100
    %1589 = vmatmul.bf16.gmra.mxu0 %v142
    %v1590 = vpop.f32.mrf.mxu0
    %v1591 = vadd.f32 %v1578, %v1590
    %v1592 = vpop.f32.mrf.mxu0
    %1593 = vdwg.mxu0
    %1594 = vmatpush.bf16.msra.mxu0 0
    %1595 = vmatpush.bf16.msra.mxu0 0
    %1596 = vmatpush.bf16.msra.mxu0 0
    %1597 = vmatpush.bf16.msra.mxu0 0
    %1598 = vmatpush.bf16.msra.mxu0 0
    %1599 = vmatpush.bf16.msra.mxu0 0
    %1600 = vmatpush.bf16.msra.mxu0 0
    %1601 = vmatpush.bf16.msra.mxu0 %v1132
    %1602 = vmatmul.bf16.gmra.mxu0 %v1332
    %v1603 = vpop.f32.mrf.mxu0
    %v1604 = vadd.f32 %v1591, %v1603
    %v1605 = vpop.f32.mrf.mxu0
    %1606 = vdwg.mxu0
    %1607 = vmatpush.bf16.msra.mxu0 %v969
    %1608 = vmatpush.bf16.msra.mxu0 %v965
    %1609 = vmatpush.bf16.msra.mxu0 %v961
    %1610 = vmatpush.bf16.msra.mxu0 %v957
    %1611 = vmatpush.bf16.msra.mxu0 %v953
    %1612 = vmatpush.bf16.msra.mxu0 %v949
    %1613 = vmatpush.bf16.msra.mxu0 %v945
    %1614 = vmatpush.bf16.msra.mxu0 %v941
    %1615 = vmatmul.bf16.gmra.mxu0 %v137
    %v1616 = vpop.f32.mrf.mxu0
    %v1617 = vadd.f32 %v345, %v1616
    %v1618 = vpop.f32.mrf.mxu0
    %1619 = vdwg.mxu0
    %1620 = vmatpush.bf16.msra.mxu0 %v1001
    %1621 = vmatpush.bf16.msra.mxu0 %v997
    %1622 = vmatpush.bf16.msra.mxu0 %v993
    %1623 = vmatpush.bf16.msra.mxu0 %v989
    %1624 = vmatpush.bf16.msra.mxu0 %v985
    %1625 = vmatpush.bf16.msra.mxu0 %v981
    %1626 = vmatpush.bf16.msra.mxu0 %v977
    %1627 = vmatpush.bf16.msra.mxu0 %v973
    %1628 = vmatmul.bf16.gmra.mxu0 %v138
    %v1629 = vpop.f32.mrf.mxu0
    %v1630 = vadd.f32 %v1617, %v1629
    %v1631 = vpop.f32.mrf.mxu0
    %1632 = vdwg.mxu0
    %1633 = vmatpush.bf16.msra.mxu0 %v1033
    %1634 = vmatpush.bf16.msra.mxu0 %v1029
    %1635 = vmatpush.bf16.msra.mxu0 %v1025
    %1636 = vmatpush.bf16.msra.mxu0 %v1021
    %1637 = vmatpush.bf16.msra.mxu0 %v1017
    %1638 = vmatpush.bf16.msra.mxu0 %v1013
    %1639 = vmatpush.bf16.msra.mxu0 %v1009
    %1640 = vmatpush.bf16.msra.mxu0 %v1005
    %1641 = vmatmul.bf16.gmra.mxu0 %v139
    %v1642 = vpop.f32.mrf.mxu0
    %v1643 = vadd.f32 %v1630, %v1642
    %v1644 = vpop.f32.mrf.mxu0
    %1645 = vdwg.mxu0
    %1646 = vmatpush.bf16.msra.mxu0 %v1065
    %1647 = vmatpush.bf16.msra.mxu0 %v1061
    %1648 = vmatpush.bf16.msra.mxu0 %v1057
    %1649 = vmatpush.bf16.msra.mxu0 %v1053
    %1650 = vmatpush.bf16.msra.mxu0 %v1049
    %1651 = vmatpush.bf16.msra.mxu0 %v1045
    %1652 = vmatpush.bf16.msra.mxu0 %v1041
    %1653 = vmatpush.bf16.msra.mxu0 %v1037
    %1654 = vmatmul.bf16.gmra.mxu0 %v140
    %v1655 = vpop.f32.mrf.mxu0
    %v1656 = vadd.f32 %v1643, %v1655
    %v1657 = vpop.f32.mrf.mxu0
    %1658 = vdwg.mxu0
    %1659 = vmatpush.bf16.msra.mxu0 %v1097
    %1660 = vmatpush.bf16.msra.mxu0 %v1093
    %1661 = vmatpush.bf16.msra.mxu0 %v1089
    %1662 = vmatpush.bf16.msra.mxu0 %v1085
    %1663 = vmatpush.bf16.msra.mxu0 %v1081
    %1664 = vmatpush.bf16.msra.mxu0 %v1077
    %1665 = vmatpush.bf16.msra.mxu0 %v1073
    %1666 = vmatpush.bf16.msra.mxu0 %v1069
    %1667 = vmatmul.bf16.gmra.mxu0 %v141
    %v1668 = vpop.f32.mrf.mxu0
    %v1669 = vadd.f32 %v1656, %v1668
    %v1670 = vpop.f32.mrf.mxu0
    %1671 = vdwg.mxu0
    %1672 = vmatpush.bf16.msra.mxu0 %v1129
    %1673 = vmatpush.bf16.msra.mxu0 %v1125
    %1674 = vmatpush.bf16.msra.mxu0 %v1121
    %1675 = vmatpush.bf16.msra.mxu0 %v1117
    %1676 = vmatpush.bf16.msra.mxu0 %v1113
    %1677 = vmatpush.bf16.msra.mxu0 %v1109
    %1678 = vmatpush.bf16.msra.mxu0 %v1105
    %1679 = vmatpush.bf16.msra.mxu0 %v1101
    %1680 = vmatmul.bf16.gmra.mxu0 %v142
    %v1681 = vpop.f32.mrf.mxu0
    %v1682 = vadd.f32 %v1669, %v1681
    %v1683 = vpop.f32.mrf.mxu0
    %1684 = vdwg.mxu0
    %1685 = vmatpush.bf16.msra.mxu0 0
    %1686 = vmatpush.bf16.msra.mxu0 0
    %1687 = vmatpush.bf16.msra.mxu0 0
    %1688 = vmatpush.bf16.msra.mxu0 0
    %1689 = vmatpush.bf16.msra.mxu0 0
    %1690 = vmatpush.bf16.msra.mxu0 0
    %1691 = vmatpush.bf16.msra.mxu0 0
    %1692 = vmatpush.bf16.msra.mxu0 %v1133
    %1693 = vmatmul.bf16.gmra.mxu0 %v1332
    %v1694 = vpop.f32.mrf.mxu0
    %v1695 = vadd.f32 %v1682, %v1694
    %v1696 = vpop.f32.mrf.mxu0
    %1697 = vdwg.mxu0
    %v1698 = vsub.f32 0.0, %v1422
    %v1699 = vsub.f32 0.0, %v1513
    %v1700 = vsub.f32 0.0, %v1604
    %v1701 = vsub.f32 0.0, %v1695
    %v1702 = vmul.f32 %v1698, 1.442695
    %v1703 = vpow.pop %v1702
    %v1704 = vmul.f32 %v1699, 1.442695
    %v1705 = vpow.pop %v1704
    %v1706 = vmul.f32 %v1700, 1.442695
    %v1707 = vpow.pop %v1706
    %v1708 = vmul.f32 %v1701, 1.442695
    %v1709 = vpow.pop %v1708
    %v1710 = vadd.f32 %v1703, 1.0
    %v1711 = vadd.f32 %v1705, 1.0
    %v1712 = vadd.f32 %v1707, 1.0
    %v1713 = vadd.f32 %v1709, 1.0
    %v1714 = vrcp.pop %v1710
    %v1715 = vrcp.pop %v1711
    %v1716 = vrcp.pop %v1712
    %v1717 = vrcp.pop %v1713
    %v1718 = vpack.c.bf16 %v1714, %v1714
    %v1719 = vpack.c.bf16 %v1715, %v1715
    %v1720 = vpack.c.bf16 %v1716, %v1716
    %v1721 = vpack.c.bf16 %v1717, %v1717
    %v1722 = vld [vmem:[#allocation8] sm:$0xff]
    %v1723 = vld [vmem:[#allocation8 + $0x8] sm:$0xff]
    %v1724 = vld [vmem:[#allocation8 + $0x10] sm:$0xff]
    %v1725 = vld [vmem:[#allocation8 + $0x18] sm:$0xff]
    %v1726 = vld [vmem:[#allocation8 + $0x20] sm:$0xff]
    %v1727 = vld [vmem:[#allocation8 + $0x28] sm:$0xff]
    %v1728 = vld [vmem:[#allocation8 + $0x30] sm:$0xff]
    %v1729 = vld [vmem:[#allocation8 + $0x38] sm:$0xff]
    %v1730 = vld [vmem:[#allocation8 + $0x40] sm:$0xff]
    %v1731 = vld [vmem:[#allocation8 + $0x48] sm:$0xff]
    %v1732 = vld [vmem:[#allocation8 + $0x50] sm:$0xff]
    %v1733 = vld [vmem:[#allocation8 + $0x58] sm:$0xff]
    %v1734 = vld [vmem:[#allocation8 + $0x60] sm:$0xff]
    %v1735 = vld [vmem:[#allocation8 + $0x68] sm:$0xff]
    %v1736 = vld [vmem:[#allocation8 + $0x70] sm:$0xff]
    %v1737 = vld [vmem:[#allocation8 + $0x78] sm:$0xff]
    %v1738 = vld [vmem:[#allocation8 + $0x80] sm:$0xff]
    %v1739 = vld [vmem:[#allocation8 + $0x88] sm:$0xff]
    %v1740 = vld [vmem:[#allocation8 + $0x90] sm:$0xff]
    %v1741 = vld [vmem:[#allocation8 + $0x98] sm:$0xff]
    %v1742 = vld [vmem:[#allocation8 + $0xa0] sm:$0xff]
    %v1743 = vld [vmem:[#allocation8 + $0xa8] sm:$0xff]
    %v1744 = vld [vmem:[#allocation8 + $0xb0] sm:$0xff]
    %v1745 = vld [vmem:[#allocation8 + $0xb8] sm:$0xff]
    %v1746 = vld [vmem:[#allocation8 + $0xc0] sm:$0xff]
    %v1747 = vld [vmem:[#allocation8 + $0xc8] sm:$0xff]
    %v1748 = vld [vmem:[#allocation8 + $0xd0] sm:$0xff]
    %v1749 = vld [vmem:[#allocation8 + $0xd8] sm:$0xff]
    %v1750 = vld [vmem:[#allocation8 + $0xe0] sm:$0xff]
    %v1751 = vld [vmem:[#allocation8 + $0xe8] sm:$0xff]
    %v1752 = vld [vmem:[#allocation8 + $0xf0] sm:$0xff]
    %v1753 = vld [vmem:[#allocation8 + $0xf8] sm:$0xff]
    %v1754 = vld [vmem:[#allocation8 + $0x100] sm:$0xff]
    %v1755 = vld [vmem:[#allocation8 + $0x108] sm:$0xff]
    %v1756 = vld [vmem:[#allocation8 + $0x110] sm:$0xff]
    %v1757 = vld [vmem:[#allocation8 + $0x118] sm:$0xff]
    %v1758 = vld [vmem:[#allocation8 + $0x120] sm:$0xff]
    %v1759 = vld [vmem:[#allocation8 + $0x128] sm:$0xff]
    %v1760 = vld [vmem:[#allocation8 + $0x130] sm:$0xff]
    %v1761 = vld [vmem:[#allocation8 + $0x138] sm:$0xff]
    %v1762 = vld [vmem:[#allocation8 + $0x140] sm:$0xff]
    %v1763 = vld [vmem:[#allocation8 + $0x148] sm:$0xff]
    %v1764 = vld [vmem:[#allocation8 + $0x150] sm:$0xff]
    %v1765 = vld [vmem:[#allocation8 + $0x158] sm:$0xff]
    %v1766 = vld [vmem:[#allocation8 + $0x160] sm:$0xff]
    %v1767 = vld [vmem:[#allocation8 + $0x168] sm:$0xff]
    %v1768 = vld [vmem:[#allocation8 + $0x170] sm:$0xff]
    %v1769 = vld [vmem:[#allocation8 + $0x178] sm:$0xff]
    %v1770 = vld [vmem:[#allocation8 + $0x180] sm:$0xff]
    %v1771 = vld [vmem:[#allocation8 + $0x188] sm:$0xff]
    %v1772 = vld [vmem:[#allocation8 + $0x190] sm:$0xff]
    %v1773 = vld [vmem:[#allocation8 + $0x198] sm:$0xff]
    %v1774 = vld [vmem:[#allocation8 + $0x1a0] sm:$0xff]
    %v1775 = vld [vmem:[#allocation8 + $0x1a8] sm:$0xff]
    %v1776 = vld [vmem:[#allocation8 + $0x1b0] sm:$0xff]
    %v1777 = vld [vmem:[#allocation8 + $0x1b8] sm:$0xff]
    %v1778 = vld [vmem:[#allocation8 + $0x1c0] sm:$0xff]
    %v1779 = vld [vmem:[#allocation8 + $0x1c8] sm:$0xff]
    %v1780 = vld [vmem:[#allocation8 + $0x1d0] sm:$0xff]
    %v1781 = vld [vmem:[#allocation8 + $0x1d8] sm:$0xff]
    %v1782 = vld [vmem:[#allocation8 + $0x1e0] sm:$0xff]
    %v1783 = vld [vmem:[#allocation8 + $0x1e8] sm:$0xff]
    %v1784 = vld [vmem:[#allocation8 + $0x1f0] sm:$0xff]
    %v1785 = vld [vmem:[#allocation8 + $0x1f8] sm:$0xff]
    %v1786 = vld [vmem:[#allocation8 + $0x200] sm:$0xff]
    %v1787 = vld [vmem:[#allocation8 + $0x208] sm:$0xff]
    %v1788 = vld [vmem:[#allocation8 + $0x210] sm:$0xff]
    %v1789 = vld [vmem:[#allocation8 + $0x218] sm:$0xff]
    %v1790 = vld [vmem:[#allocation8 + $0x220] sm:$0xff]
    %v1791 = vld [vmem:[#allocation8 + $0x228] sm:$0xff]
    %v1792 = vld [vmem:[#allocation8 + $0x230] sm:$0xff]
    %v1793 = vld [vmem:[#allocation8 + $0x238] sm:$0xff]
    %v1794 = vld [vmem:[#allocation8 + $0x240] sm:$0xff]
    %v1795 = vld [vmem:[#allocation8 + $0x248] sm:$0xff]
    %v1796 = vld [vmem:[#allocation8 + $0x250] sm:$0xff]
    %v1797 = vld [vmem:[#allocation8 + $0x258] sm:$0xff]
    %v1798 = vld [vmem:[#allocation8 + $0x260] sm:$0xff]
    %v1799 = vld [vmem:[#allocation8 + $0x268] sm:$0xff]
    %v1800 = vld [vmem:[#allocation8 + $0x270] sm:$0xff]
    %v1801 = vld [vmem:[#allocation8 + $0x278] sm:$0xff]
    %v1802 = vld [vmem:[#allocation8 + $0x280] sm:$0xff]
    %v1803 = vld [vmem:[#allocation8 + $0x288] sm:$0xff]
    %v1804 = vld [vmem:[#allocation8 + $0x290] sm:$0xff]
    %v1805 = vld [vmem:[#allocation8 + $0x298] sm:$0xff]
    %v1806 = vld [vmem:[#allocation8 + $0x2a0] sm:$0xff]
    %v1807 = vld [vmem:[#allocation8 + $0x2a8] sm:$0xff]
    %v1808 = vld [vmem:[#allocation8 + $0x2b0] sm:$0xff]
    %v1809 = vld [vmem:[#allocation8 + $0x2b8] sm:$0xff]
    %v1810 = vld [vmem:[#allocation8 + $0x2c0] sm:$0xff]
    %v1811 = vld [vmem:[#allocation8 + $0x2c8] sm:$0xff]
    %v1812 = vld [vmem:[#allocation8 + $0x2d0] sm:$0xff]
    %v1813 = vld [vmem:[#allocation8 + $0x2d8] sm:$0xff]
    %v1814 = vld [vmem:[#allocation8 + $0x2e0] sm:$0xff]
    %v1815 = vld [vmem:[#allocation8 + $0x2e8] sm:$0xff]
    %v1816 = vld [vmem:[#allocation8 + $0x2f0] sm:$0xff]
    %v1817 = vld [vmem:[#allocation8 + $0x2f8] sm:$0xff]
    %v1818 = vld [vmem:[#allocation8 + $0x300] sm:$0xff]
    %v1819 = vld [vmem:[#allocation8 + $0x308] sm:$0xff]
    %v1820 = vld [vmem:[#allocation8 + $0x310] sm:$0xff]
    %v1821 = vld [vmem:[#allocation8 + $0x318] sm:$0xff]
    %v1822 = vld [vmem:[#allocation8 + $0x320] sm:$0xff]
    %v1823 = vld [vmem:[#allocation8 + $0x328] sm:$0xff]
    %v1824 = vld [vmem:[#allocation8 + $0x330] sm:$0xff]
    %v1825 = vld [vmem:[#allocation8 + $0x338] sm:$0xff]
    %v1826 = vld [vmem:[#allocation8 + $0x340] sm:$0xff]
    %v1827 = vld [vmem:[#allocation8 + $0x348] sm:$0xff]
    %v1828 = vld [vmem:[#allocation8 + $0x350] sm:$0xff]
    %v1829 = vld [vmem:[#allocation8 + $0x358] sm:$0xff]
    %v1830 = vld [vmem:[#allocation8 + $0x360] sm:$0xff]
    %v1831 = vld [vmem:[#allocation8 + $0x368] sm:$0xff]
    %v1832 = vld [vmem:[#allocation8 + $0x370] sm:$0xff]
    %v1833 = vld [vmem:[#allocation8 + $0x378] sm:$0xff]
    %v1834 = vld [vmem:[#allocation8 + $0x380] sm:$0xff]
    %v1835 = vld [vmem:[#allocation8 + $0x388] sm:$0xff]
    %v1836 = vld [vmem:[#allocation8 + $0x390] sm:$0xff]
    %v1837 = vld [vmem:[#allocation8 + $0x398] sm:$0xff]
    %v1838 = vld [vmem:[#allocation8 + $0x3a0] sm:$0xff]
    %v1839 = vld [vmem:[#allocation8 + $0x3a8] sm:$0xff]
    %v1840 = vld [vmem:[#allocation8 + $0x3b0] sm:$0xff]
    %v1841 = vld [vmem:[#allocation8 + $0x3b8] sm:$0xff]
    %v1842 = vld [vmem:[#allocation8 + $0x3c0] sm:$0xff]
    %v1843 = vld [vmem:[#allocation8 + $0x3c8] sm:$0xff]
    %v1844 = vld [vmem:[#allocation8 + $0x3d0] sm:$0xff]
    %v1845 = vld [vmem:[#allocation8 + $0x3d8] sm:$0xff]
    %v1846 = vld [vmem:[#allocation8 + $0x3e0] sm:$0xff]
    %v1847 = vld [vmem:[#allocation8 + $0x3e8] sm:$0xff]
    %v1848 = vld [vmem:[#allocation8 + $0x3f0] sm:$0xff]
    %v1849 = vld [vmem:[#allocation8 + $0x3f8] sm:$0xff]
    %v1850 = vld [vmem:[#allocation10] sm:$0xf]
    %v1852 = vperm.slane %v1850, 0
    %v1853 = vperm.slane %v1850, 1
    %v1854 = vperm.slane %v1850, 2
    %v1855 = vperm.slane %v1850, 3
    %v1988 = vunpack.c.l.b16 %v1722
    %v1989 = vunpack.c.h.b16 %v1722
    %v1990 = vunpack.c.l.b16 %v1723
    %v1991 = vunpack.c.h.b16 %v1723
    %v1992 = vunpack.c.l.b16 %v1724
    %v1993 = vunpack.c.h.b16 %v1724
    %v1994 = vunpack.c.l.b16 %v1725
    %v1995 = vunpack.c.h.b16 %v1725
    %v1996 = vunpack.c.l.b16 %v1726
    %v1997 = vunpack.c.h.b16 %v1726
    %v1998 = vunpack.c.l.b16 %v1727
    %v1999 = vunpack.c.h.b16 %v1727
    %v2000 = vunpack.c.l.b16 %v1728
    %v2001 = vunpack.c.h.b16 %v1728
    %v2002 = vunpack.c.l.b16 %v1729
    %v2003 = vunpack.c.h.b16 %v1729
    %v2004 = vunpack.c.l.b16 %v1730
    %v2005 = vunpack.c.h.b16 %v1730
    %v2006 = vunpack.c.l.b16 %v1731
    %v2007 = vunpack.c.h.b16 %v1731
    %v2008 = vunpack.c.l.b16 %v1732
    %v2009 = vunpack.c.h.b16 %v1732
    %v2010 = vunpack.c.l.b16 %v1733
    %v2011 = vunpack.c.h.b16 %v1733
    %v2012 = vunpack.c.l.b16 %v1734
    %v2013 = vunpack.c.h.b16 %v1734
    %v2014 = vunpack.c.l.b16 %v1735
    %v2015 = vunpack.c.h.b16 %v1735
    %v2016 = vunpack.c.l.b16 %v1736
    %v2017 = vunpack.c.h.b16 %v1736
    %v2018 = vunpack.c.l.b16 %v1737
    %v2019 = vunpack.c.h.b16 %v1737
    %v2020 = vunpack.c.l.b16 %v1738
    %v2021 = vunpack.c.h.b16 %v1738
    %v2022 = vunpack.c.l.b16 %v1739
    %v2023 = vunpack.c.h.b16 %v1739
    %v2024 = vunpack.c.l.b16 %v1740
    %v2025 = vunpack.c.h.b16 %v1740
    %v2026 = vunpack.c.l.b16 %v1741
    %v2027 = vunpack.c.h.b16 %v1741
    %v2028 = vunpack.c.l.b16 %v1742
    %v2029 = vunpack.c.h.b16 %v1742
    %v2030 = vunpack.c.l.b16 %v1743
    %v2031 = vunpack.c.h.b16 %v1743
    %v2032 = vunpack.c.l.b16 %v1744
    %v2033 = vunpack.c.h.b16 %v1744
    %v2034 = vunpack.c.l.b16 %v1745
    %v2035 = vunpack.c.h.b16 %v1745
    %v2036 = vunpack.c.l.b16 %v1746
    %v2037 = vunpack.c.h.b16 %v1746
    %v2038 = vunpack.c.l.b16 %v1747
    %v2039 = vunpack.c.h.b16 %v1747
    %v2040 = vunpack.c.l.b16 %v1748
    %v2041 = vunpack.c.h.b16 %v1748
    %v2042 = vunpack.c.l.b16 %v1749
    %v2043 = vunpack.c.h.b16 %v1749
    %v2044 = vunpack.c.l.b16 %v1750
    %v2045 = vunpack.c.h.b16 %v1750
    %v2046 = vunpack.c.l.b16 %v1751
    %v2047 = vunpack.c.h.b16 %v1751
    %v2048 = vunpack.c.l.b16 %v1752
    %v2049 = vunpack.c.h.b16 %v1752
    %v2050 = vunpack.c.l.b16 %v1753
    %v2051 = vunpack.c.h.b16 %v1753
    %v2052 = vunpack.c.l.b16 %v1754
    %v2053 = vunpack.c.h.b16 %v1754
    %v2054 = vunpack.c.l.b16 %v1755
    %v2055 = vunpack.c.h.b16 %v1755
    %v2056 = vunpack.c.l.b16 %v1756
    %v2057 = vunpack.c.h.b16 %v1756
    %v2058 = vunpack.c.l.b16 %v1757
    %v2059 = vunpack.c.h.b16 %v1757
    %v2060 = vunpack.c.l.b16 %v1758
    %v2061 = vunpack.c.h.b16 %v1758
    %v2062 = vunpack.c.l.b16 %v1759
    %v2063 = vunpack.c.h.b16 %v1759
    %v2064 = vunpack.c.l.b16 %v1760
    %v2065 = vunpack.c.h.b16 %v1760
    %v2066 = vunpack.c.l.b16 %v1761
    %v2067 = vunpack.c.h.b16 %v1761
    %v2068 = vunpack.c.l.b16 %v1762
    %v2069 = vunpack.c.h.b16 %v1762
    %v2070 = vunpack.c.l.b16 %v1763
    %v2071 = vunpack.c.h.b16 %v1763
    %v2072 = vunpack.c.l.b16 %v1764
    %v2073 = vunpack.c.h.b16 %v1764
    %v2074 = vunpack.c.l.b16 %v1765
    %v2075 = vunpack.c.h.b16 %v1765
    %v2076 = vunpack.c.l.b16 %v1766
    %v2077 = vunpack.c.h.b16 %v1766
    %v2078 = vunpack.c.l.b16 %v1767
    %v2079 = vunpack.c.h.b16 %v1767
    %v2080 = vunpack.c.l.b16 %v1768
    %v2081 = vunpack.c.h.b16 %v1768
    %v2082 = vunpack.c.l.b16 %v1769
    %v2083 = vunpack.c.h.b16 %v1769
    %v2084 = vunpack.c.l.b16 %v1770
    %v2085 = vunpack.c.h.b16 %v1770
    %v2086 = vunpack.c.l.b16 %v1771
    %v2087 = vunpack.c.h.b16 %v1771
    %v2088 = vunpack.c.l.b16 %v1772
    %v2089 = vunpack.c.h.b16 %v1772
    %v2090 = vunpack.c.l.b16 %v1773
    %v2091 = vunpack.c.h.b16 %v1773
    %v2092 = vunpack.c.l.b16 %v1774
    %v2093 = vunpack.c.h.b16 %v1774
    %v2094 = vunpack.c.l.b16 %v1775
    %v2095 = vunpack.c.h.b16 %v1775
    %v2096 = vunpack.c.l.b16 %v1776
    %v2097 = vunpack.c.h.b16 %v1776
    %v2098 = vunpack.c.l.b16 %v1777
    %v2099 = vunpack.c.h.b16 %v1777
    %v2100 = vunpack.c.l.b16 %v1778
    %v2101 = vunpack.c.h.b16 %v1778
    %v2102 = vunpack.c.l.b16 %v1779
    %v2103 = vunpack.c.h.b16 %v1779
    %v2104 = vunpack.c.l.b16 %v1780
    %v2105 = vunpack.c.h.b16 %v1780
    %v2106 = vunpack.c.l.b16 %v1781
    %v2107 = vunpack.c.h.b16 %v1781
    %v2108 = vunpack.c.l.b16 %v1782
    %v2109 = vunpack.c.h.b16 %v1782
    %v2110 = vunpack.c.l.b16 %v1783
    %v2111 = vunpack.c.h.b16 %v1783
    %v2112 = vunpack.c.l.b16 %v1784
    %v2113 = vunpack.c.h.b16 %v1784
    %v2114 = vunpack.c.l.b16 %v1785
    %v2115 = vunpack.c.h.b16 %v1785
    %v2116 = vunpack.c.l.b16 %v1786
    %v2117 = vunpack.c.h.b16 %v1786
    %v2118 = vunpack.c.l.b16 %v1787
    %v2119 = vunpack.c.h.b16 %v1787
    %v2120 = vunpack.c.l.b16 %v1788
    %v2121 = vunpack.c.h.b16 %v1788
    %v2122 = vunpack.c.l.b16 %v1789
    %v2123 = vunpack.c.h.b16 %v1789
    %v2124 = vunpack.c.l.b16 %v1790
    %v2125 = vunpack.c.h.b16 %v1790
    %v2126 = vunpack.c.l.b16 %v1791
    %v2127 = vunpack.c.h.b16 %v1791
    %v2128 = vunpack.c.l.b16 %v1792
    %v2129 = vunpack.c.h.b16 %v1792
    %v2130 = vunpack.c.l.b16 %v1793
    %v2131 = vunpack.c.h.b16 %v1793
    %v2132 = vunpack.c.l.b16 %v1794
    %v2133 = vunpack.c.h.b16 %v1794
    %v2134 = vunpack.c.l.b16 %v1795
    %v2135 = vunpack.c.h.b16 %v1795
    %v2136 = vunpack.c.l.b16 %v1796
    %v2137 = vunpack.c.h.b16 %v1796
    %v2138 = vunpack.c.l.b16 %v1797
    %v2139 = vunpack.c.h.b16 %v1797
    %v2140 = vunpack.c.l.b16 %v1798
    %v2141 = vunpack.c.h.b16 %v1798
    %v2142 = vunpack.c.l.b16 %v1799
    %v2143 = vunpack.c.h.b16 %v1799
    %v2144 = vunpack.c.l.b16 %v1800
    %v2145 = vunpack.c.h.b16 %v1800
    %v2146 = vunpack.c.l.b16 %v1801
    %v2147 = vunpack.c.h.b16 %v1801
    %v2148 = vunpack.c.l.b16 %v1802
    %v2149 = vunpack.c.h.b16 %v1802
    %v2150 = vunpack.c.l.b16 %v1803
    %v2151 = vunpack.c.h.b16 %v1803
    %v2152 = vunpack.c.l.b16 %v1804
    %v2153 = vunpack.c.h.b16 %v1804
    %v2154 = vunpack.c.l.b16 %v1805
    %v2155 = vunpack.c.h.b16 %v1805
    %v2156 = vunpack.c.l.b16 %v1806
    %v2157 = vunpack.c.h.b16 %v1806
    %v2158 = vunpack.c.l.b16 %v1807
    %v2159 = vunpack.c.h.b16 %v1807
    %v2160 = vunpack.c.l.b16 %v1808
    %v2161 = vunpack.c.h.b16 %v1808
    %v2162 = vunpack.c.l.b16 %v1809
    %v2163 = vunpack.c.h.b16 %v1809
    %v2164 = vunpack.c.l.b16 %v1810
    %v2165 = vunpack.c.h.b16 %v1810
    %v2166 = vunpack.c.l.b16 %v1811
    %v2167 = vunpack.c.h.b16 %v1811
    %v2168 = vunpack.c.l.b16 %v1812
    %v2169 = vunpack.c.h.b16 %v1812
    %v2170 = vunpack.c.l.b16 %v1813
    %v2171 = vunpack.c.h.b16 %v1813
    %v2172 = vunpack.c.l.b16 %v1814
    %v2173 = vunpack.c.h.b16 %v1814
    %v2174 = vunpack.c.l.b16 %v1815
    %v2175 = vunpack.c.h.b16 %v1815
    %v2176 = vunpack.c.l.b16 %v1816
    %v2177 = vunpack.c.h.b16 %v1816
    %v2178 = vunpack.c.l.b16 %v1817
    %v2179 = vunpack.c.h.b16 %v1817
    %v2180 = vunpack.c.l.b16 %v1818
    %v2181 = vunpack.c.h.b16 %v1818
    %v2182 = vunpack.c.l.b16 %v1819
    %v2183 = vunpack.c.h.b16 %v1819
    %v2184 = vunpack.c.l.b16 %v1820
    %v2185 = vunpack.c.h.b16 %v1820
    %v2186 = vunpack.c.l.b16 %v1821
    %v2187 = vunpack.c.h.b16 %v1821
    %v2188 = vunpack.c.l.b16 %v1822
    %v2189 = vunpack.c.h.b16 %v1822
    %v2190 = vunpack.c.l.b16 %v1823
    %v2191 = vunpack.c.h.b16 %v1823
    %v2192 = vunpack.c.l.b16 %v1824
    %v2193 = vunpack.c.h.b16 %v1824
    %v2194 = vunpack.c.l.b16 %v1825
    %v2195 = vunpack.c.h.b16 %v1825
    %v2196 = vunpack.c.l.b16 %v1826
    %v2197 = vunpack.c.h.b16 %v1826
    %v2198 = vunpack.c.l.b16 %v1827
    %v2199 = vunpack.c.h.b16 %v1827
    %v2200 = vunpack.c.l.b16 %v1828
    %v2201 = vunpack.c.h.b16 %v1828
    %v2202 = vunpack.c.l.b16 %v1829
    %v2203 = vunpack.c.h.b16 %v1829
    %v2204 = vunpack.c.l.b16 %v1830
    %v2205 = vunpack.c.h.b16 %v1830
    %v2206 = vunpack.c.l.b16 %v1831
    %v2207 = vunpack.c.h.b16 %v1831
    %v2208 = vunpack.c.l.b16 %v1832
    %v2209 = vunpack.c.h.b16 %v1832
    %v2210 = vunpack.c.l.b16 %v1833
    %v2211 = vunpack.c.h.b16 %v1833
    %v2212 = vunpack.c.l.b16 %v1834
    %v2213 = vunpack.c.h.b16 %v1834
    %v2214 = vunpack.c.l.b16 %v1835
    %v2215 = vunpack.c.h.b16 %v1835
    %v2216 = vunpack.c.l.b16 %v1836
    %v2217 = vunpack.c.h.b16 %v1836
    %v2218 = vunpack.c.l.b16 %v1837
    %v2219 = vunpack.c.h.b16 %v1837
    %v2220 = vunpack.c.l.b16 %v1838
    %v2221 = vunpack.c.h.b16 %v1838
    %v2222 = vunpack.c.l.b16 %v1839
    %v2223 = vunpack.c.h.b16 %v1839
    %v2224 = vunpack.c.l.b16 %v1840
    %v2225 = vunpack.c.h.b16 %v1840
    %v2226 = vunpack.c.l.b16 %v1841
    %v2227 = vunpack.c.h.b16 %v1841
    %v2228 = vunpack.c.l.b16 %v1842
    %v2229 = vunpack.c.h.b16 %v1842
    %v2230 = vunpack.c.l.b16 %v1843
    %v2231 = vunpack.c.h.b16 %v1843
    %v2232 = vunpack.c.l.b16 %v1844
    %v2233 = vunpack.c.h.b16 %v1844
    %v2234 = vunpack.c.l.b16 %v1845
    %v2235 = vunpack.c.h.b16 %v1845
    %v2236 = vunpack.c.l.b16 %v1846
    %v2237 = vunpack.c.h.b16 %v1846
    %v2238 = vunpack.c.l.b16 %v1847
    %v2239 = vunpack.c.h.b16 %v1847
    %v2240 = vunpack.c.l.b16 %v1848
    %v2241 = vunpack.c.h.b16 %v1848
    %v2242 = vunpack.c.l.b16 %v1849
    %v2243 = vunpack.c.h.b16 %v1849
    %v2244 = vpack.c.b16 %v1992, %v1988
    %v2245 = vpack.c.b16 %v1993, %v1989
    %v2246 = vpack.c.b16 %v1994, %v1990
    %v2247 = vpack.c.b16 %v1995, %v1991
    %v2248 = vpack.c.b16 %v2000, %v1996
    %v2249 = vpack.c.b16 %v2001, %v1997
    %v2250 = vpack.c.b16 %v2002, %v1998
    %v2251 = vpack.c.b16 %v2003, %v1999
    %v2252 = vpack.c.b16 %v2008, %v2004
    %v2253 = vpack.c.b16 %v2009, %v2005
    %v2254 = vpack.c.b16 %v2010, %v2006
    %v2255 = vpack.c.b16 %v2011, %v2007
    %v2256 = vpack.c.b16 %v2016, %v2012
    %v2257 = vpack.c.b16 %v2017, %v2013
    %v2258 = vpack.c.b16 %v2018, %v2014
    %v2259 = vpack.c.b16 %v2019, %v2015
    %v2260 = vpack.c.b16 %v2024, %v2020
    %v2261 = vpack.c.b16 %v2025, %v2021
    %v2262 = vpack.c.b16 %v2026, %v2022
    %v2263 = vpack.c.b16 %v2027, %v2023
    %v2264 = vpack.c.b16 %v2032, %v2028
    %v2265 = vpack.c.b16 %v2033, %v2029
    %v2266 = vpack.c.b16 %v2034, %v2030
    %v2267 = vpack.c.b16 %v2035, %v2031
    %v2268 = vpack.c.b16 %v2040, %v2036
    %v2269 = vpack.c.b16 %v2041, %v2037
    %v2270 = vpack.c.b16 %v2042, %v2038
    %v2271 = vpack.c.b16 %v2043, %v2039
    %v2272 = vpack.c.b16 %v2048, %v2044
    %v2273 = vpack.c.b16 %v2049, %v2045
    %v2274 = vpack.c.b16 %v2050, %v2046
    %v2275 = vpack.c.b16 %v2051, %v2047
    %v2276 = vpack.c.b16 %v2056, %v2052
    %v2277 = vpack.c.b16 %v2057, %v2053
    %v2278 = vpack.c.b16 %v2058, %v2054
    %v2279 = vpack.c.b16 %v2059, %v2055
    %v2280 = vpack.c.b16 %v2064, %v2060
    %v2281 = vpack.c.b16 %v2065, %v2061
    %v2282 = vpack.c.b16 %v2066, %v2062
    %v2283 = vpack.c.b16 %v2067, %v2063
    %v2284 = vpack.c.b16 %v2072, %v2068
    %v2285 = vpack.c.b16 %v2073, %v2069
    %v2286 = vpack.c.b16 %v2074, %v2070
    %v2287 = vpack.c.b16 %v2075, %v2071
    %v2288 = vpack.c.b16 %v2080, %v2076
    %v2289 = vpack.c.b16 %v2081, %v2077
    %v2290 = vpack.c.b16 %v2082, %v2078
    %v2291 = vpack.c.b16 %v2083, %v2079
    %v2292 = vpack.c.b16 %v2088, %v2084
    %v2293 = vpack.c.b16 %v2089, %v2085
    %v2294 = vpack.c.b16 %v2090, %v2086
    %v2295 = vpack.c.b16 %v2091, %v2087
    %v2296 = vpack.c.b16 %v2096, %v2092
    %v2297 = vpack.c.b16 %v2097, %v2093
    %v2298 = vpack.c.b16 %v2098, %v2094
    %v2299 = vpack.c.b16 %v2099, %v2095
    %v2300 = vpack.c.b16 %v2104, %v2100
    %v2301 = vpack.c.b16 %v2105, %v2101
    %v2302 = vpack.c.b16 %v2106, %v2102
    %v2303 = vpack.c.b16 %v2107, %v2103
    %v2304 = vpack.c.b16 %v2112, %v2108
    %v2305 = vpack.c.b16 %v2113, %v2109
    %v2306 = vpack.c.b16 %v2114, %v2110
    %v2307 = vpack.c.b16 %v2115, %v2111
    %v2308 = vpack.c.b16 %v2120, %v2116
    %v2309 = vpack.c.b16 %v2121, %v2117
    %v2310 = vpack.c.b16 %v2122, %v2118
    %v2311 = vpack.c.b16 %v2123, %v2119
    %v2312 = vpack.c.b16 %v2128, %v2124
    %v2313 = vpack.c.b16 %v2129, %v2125
    %v2314 = vpack.c.b16 %v2130, %v2126
    %v2315 = vpack.c.b16 %v2131, %v2127
    %v2316 = vpack.c.b16 %v2136, %v2132
    %v2317 = vpack.c.b16 %v2137, %v2133
    %v2318 = vpack.c.b16 %v2138, %v2134
    %v2319 = vpack.c.b16 %v2139, %v2135
    %v2320 = vpack.c.b16 %v2144, %v2140
    %v2321 = vpack.c.b16 %v2145, %v2141
    %v2322 = vpack.c.b16 %v2146, %v2142
    %v2323 = vpack.c.b16 %v2147, %v2143
    %v2324 = vpack.c.b16 %v2152, %v2148
    %v2325 = vpack.c.b16 %v2153, %v2149
    %v2326 = vpack.c.b16 %v2154, %v2150
    %v2327 = vpack.c.b16 %v2155, %v2151
    %v2328 = vpack.c.b16 %v2160, %v2156
    %v2329 = vpack.c.b16 %v2161, %v2157
    %v2330 = vpack.c.b16 %v2162, %v2158
    %v2331 = vpack.c.b16 %v2163, %v2159
    %v2332 = vpack.c.b16 %v2168, %v2164
    %v2333 = vpack.c.b16 %v2169, %v2165
    %v2334 = vpack.c.b16 %v2170, %v2166
    %v2335 = vpack.c.b16 %v2171, %v2167
    %v2336 = vpack.c.b16 %v2176, %v2172
    %v2337 = vpack.c.b16 %v2177, %v2173
    %v2338 = vpack.c.b16 %v2178, %v2174
    %v2339 = vpack.c.b16 %v2179, %v2175
    %v2340 = vpack.c.b16 %v2184, %v2180
    %v2341 = vpack.c.b16 %v2185, %v2181
    %v2342 = vpack.c.b16 %v2186, %v2182
    %v2343 = vpack.c.b16 %v2187, %v2183
    %v2344 = vpack.c.b16 %v2192, %v2188
    %v2345 = vpack.c.b16 %v2193, %v2189
    %v2346 = vpack.c.b16 %v2194, %v2190
    %v2347 = vpack.c.b16 %v2195, %v2191
    %v2348 = vpack.c.b16 %v2200, %v2196
    %v2349 = vpack.c.b16 %v2201, %v2197
    %v2350 = vpack.c.b16 %v2202, %v2198
    %v2351 = vpack.c.b16 %v2203, %v2199
    %v2352 = vpack.c.b16 %v2208, %v2204
    %v2353 = vpack.c.b16 %v2209, %v2205
    %v2354 = vpack.c.b16 %v2210, %v2206
    %v2355 = vpack.c.b16 %v2211, %v2207
    %v2356 = vpack.c.b16 %v2216, %v2212
    %v2357 = vpack.c.b16 %v2217, %v2213
    %v2358 = vpack.c.b16 %v2218, %v2214
    %v2359 = vpack.c.b16 %v2219, %v2215
    %v2360 = vpack.c.b16 %v2224, %v2220
    %v2361 = vpack.c.b16 %v2225, %v2221
    %v2362 = vpack.c.b16 %v2226, %v2222
    %v2363 = vpack.c.b16 %v2227, %v2223
    %v2364 = vpack.c.b16 %v2232, %v2228
    %v2365 = vpack.c.b16 %v2233, %v2229
    %v2366 = vpack.c.b16 %v2234, %v2230
    %v2367 = vpack.c.b16 %v2235, %v2231
    %v2368 = vpack.c.b16 %v2240, %v2236
    %v2369 = vpack.c.b16 %v2241, %v2237
    %v2370 = vpack.c.b16 %v2242, %v2238
    %v2371 = vpack.c.b16 %v2243, %v2239
    %2500 = vmatpush.bf16.msra.mxu0 %v2272
    %2501 = vmatpush.bf16.msra.mxu0 %v2268
    %2502 = vmatpush.bf16.msra.mxu0 %v2264
    %2503 = vmatpush.bf16.msra.mxu0 %v2260
    %2504 = vmatpush.bf16.msra.mxu0 %v2256
    %2505 = vmatpush.bf16.msra.mxu0 %v2252
    %2506 = vmatpush.bf16.msra.mxu0 %v2248
    %2507 = vmatpush.bf16.msra.mxu0 %v2244
    %2508 = vmatmul.bf16.gmra.mxu0 %v1718
    %v2509 = vpop.f32.mrf.mxu0
    %v2510 = vadd.f32 %v1852, %v2509
    %v2511 = vpop.f32.mrf.mxu0
    %2512 = vdwg.mxu0
    %2513 = vmatpush.bf16.msra.mxu0 %v2304
    %2514 = vmatpush.bf16.msra.mxu0 %v2300
    %2515 = vmatpush.bf16.msra.mxu0 %v2296
    %2516 = vmatpush.bf16.msra.mxu0 %v2292
    %2517 = vmatpush.bf16.msra.mxu0 %v2288
    %2518 = vmatpush.bf16.msra.mxu0 %v2284
    %2519 = vmatpush.bf16.msra.mxu0 %v2280
    %2520 = vmatpush.bf16.msra.mxu0 %v2276
    %2521 = vmatmul.bf16.gmra.mxu0 %v1719
    %v2522 = vpop.f32.mrf.mxu0
    %v2523 = vadd.f32 %v2510, %v2522
    %v2524 = vpop.f32.mrf.mxu0
    %2525 = vdwg.mxu0
    %2526 = vmatpush.bf16.msra.mxu0 %v2336
    %2527 = vmatpush.bf16.msra.mxu0 %v2332
    %2528 = vmatpush.bf16.msra.mxu0 %v2328
    %2529 = vmatpush.bf16.msra.mxu0 %v2324
    %2530 = vmatpush.bf16.msra.mxu0 %v2320
    %2531 = vmatpush.bf16.msra.mxu0 %v2316
    %2532 = vmatpush.bf16.msra.mxu0 %v2312
    %2533 = vmatpush.bf16.msra.mxu0 %v2308
    %2534 = vmatmul.bf16.gmra.mxu0 %v1720
    %v2535 = vpop.f32.mrf.mxu0
    %v2536 = vadd.f32 %v2523, %v2535
    %v2537 = vpop.f32.mrf.mxu0
    %2538 = vdwg.mxu0
    %2539 = vmatpush.bf16.msra.mxu0 %v2368
    %2540 = vmatpush.bf16.msra.mxu0 %v2364
    %2541 = vmatpush.bf16.msra.mxu0 %v2360
    %2542 = vmatpush.bf16.msra.mxu0 %v2356
    %2543 = vmatpush.bf16.msra.mxu0 %v2352
    %2544 = vmatpush.bf16.msra.mxu0 %v2348
    %2545 = vmatpush.bf16.msra.mxu0 %v2344
    %2546 = vmatpush.bf16.msra.mxu0 %v2340
    %2547 = vmatmul.bf16.gmra.mxu0 %v1721
    %v2548 = vpop.f32.mrf.mxu0
    %v2549 = vadd.f32 %v2536, %v2548
    %v2550 = vpop.f32.mrf.mxu0
    %2551 = vdwg.mxu0
    %2552 = vmatpush.bf16.msra.mxu0 %v2273
    %2553 = vmatpush.bf16.msra.mxu0 %v2269
    %2554 = vmatpush.bf16.msra.mxu0 %v2265
    %2555 = vmatpush.bf16.msra.mxu0 %v2261
    %2556 = vmatpush.bf16.msra.mxu0 %v2257
    %2557 = vmatpush.bf16.msra.mxu0 %v2253
    %2558 = vmatpush.bf16.msra.mxu0 %v2249
    %2559 = vmatpush.bf16.msra.mxu0 %v2245
    %2560 = vmatmul.bf16.gmra.mxu0 %v1718
    %v2561 = vpop.f32.mrf.mxu0
    %v2562 = vadd.f32 %v1853, %v2561
    %v2563 = vpop.f32.mrf.mxu0
    %2564 = vdwg.mxu0
    %2565 = vmatpush.bf16.msra.mxu0 %v2305
    %2566 = vmatpush.bf16.msra.mxu0 %v2301
    %2567 = vmatpush.bf16.msra.mxu0 %v2297
    %2568 = vmatpush.bf16.msra.mxu0 %v2293
    %2569 = vmatpush.bf16.msra.mxu0 %v2289
    %2570 = vmatpush.bf16.msra.mxu0 %v2285
    %2571 = vmatpush.bf16.msra.mxu0 %v2281
    %2572 = vmatpush.bf16.msra.mxu0 %v2277
    %2573 = vmatmul.bf16.gmra.mxu0 %v1719
    %v2574 = vpop.f32.mrf.mxu0
    %v2575 = vadd.f32 %v2562, %v2574
    %v2576 = vpop.f32.mrf.mxu0
    %2577 = vdwg.mxu0
    %2578 = vmatpush.bf16.msra.mxu0 %v2337
    %2579 = vmatpush.bf16.msra.mxu0 %v2333
    %2580 = vmatpush.bf16.msra.mxu0 %v2329
    %2581 = vmatpush.bf16.msra.mxu0 %v2325
    %2582 = vmatpush.bf16.msra.mxu0 %v2321
    %2583 = vmatpush.bf16.msra.mxu0 %v2317
    %2584 = vmatpush.bf16.msra.mxu0 %v2313
    %2585 = vmatpush.bf16.msra.mxu0 %v2309
    %2586 = vmatmul.bf16.gmra.mxu0 %v1720
    %v2587 = vpop.f32.mrf.mxu0
    %v2588 = vadd.f32 %v2575, %v2587
    %v2589 = vpop.f32.mrf.mxu0
    %2590 = vdwg.mxu0
    %2591 = vmatpush.bf16.msra.mxu0 %v2369
    %2592 = vmatpush.bf16.msra.mxu0 %v2365
    %2593 = vmatpush.bf16.msra.mxu0 %v2361
    %2594 = vmatpush.bf16.msra.mxu0 %v2357
    %2595 = vmatpush.bf16.msra.mxu0 %v2353
    %2596 = vmatpush.bf16.msra.mxu0 %v2349
    %2597 = vmatpush.bf16.msra.mxu0 %v2345
    %2598 = vmatpush.bf16.msra.mxu0 %v2341
    %2599 = vmatmul.bf16.gmra.mxu0 %v1721
    %v2600 = vpop.f32.mrf.mxu0
    %v2601 = vadd.f32 %v2588, %v2600
    %v2602 = vpop.f32.mrf.mxu0
    %2603 = vdwg.mxu0
    %2604 = vmatpush.bf16.msra.mxu0 %v2274
    %2605 = vmatpush.bf16.msra.mxu0 %v2270
    %2606 = vmatpush.bf16.msra.mxu0 %v2266
    %2607 = vmatpush.bf16.msra.mxu0 %v2262
    %2608 = vmatpush.bf16.msra.mxu0 %v2258
    %2609 = vmatpush.bf16.msra.mxu0 %v2254
    %2610 = vmatpush.bf16.msra.mxu0 %v2250
    %2611 = vmatpush.bf16.msra.mxu0 %v2246
    %2612 = vmatmul.bf16.gmra.mxu0 %v1718
    %v2613 = vpop.f32.mrf.mxu0
    %v2614 = vadd.f32 %v1854, %v2613
    %v2615 = vpop.f32.mrf.mxu0
    %2616 = vdwg.mxu0
    %2617 = vmatpush.bf16.msra.mxu0 %v2306
    %2618 = vmatpush.bf16.msra.mxu0 %v2302
    %2619 = vmatpush.bf16.msra.mxu0 %v2298
    %2620 = vmatpush.bf16.msra.mxu0 %v2294
    %2621 = vmatpush.bf16.msra.mxu0 %v2290
    %2622 = vmatpush.bf16.msra.mxu0 %v2286
    %2623 = vmatpush.bf16.msra.mxu0 %v2282
    %2624 = vmatpush.bf16.msra.mxu0 %v2278
    %2625 = vmatmul.bf16.gmra.mxu0 %v1719
    %v2626 = vpop.f32.mrf.mxu0
    %v2627 = vadd.f32 %v2614, %v2626
    %v2628 = vpop.f32.mrf.mxu0
    %2629 = vdwg.mxu0
    %2630 = vmatpush.bf16.msra.mxu0 %v2338
    %2631 = vmatpush.bf16.msra.mxu0 %v2334
    %2632 = vmatpush.bf16.msra.mxu0 %v2330
    %2633 = vmatpush.bf16.msra.mxu0 %v2326
    %2634 = vmatpush.bf16.msra.mxu0 %v2322
    %2635 = vmatpush.bf16.msra.mxu0 %v2318
    %2636 = vmatpush.bf16.msra.mxu0 %v2314
    %2637 = vmatpush.bf16.msra.mxu0 %v2310
    %2638 = vmatmul.bf16.gmra.mxu0 %v1720
    %v2639 = vpop.f32.mrf.mxu0
    %v2640 = vadd.f32 %v2627, %v2639
    %v2641 = vpop.f32.mrf.mxu0
    %2642 = vdwg.mxu0
    %2643 = vmatpush.bf16.msra.mxu0 %v2370
    %2644 = vmatpush.bf16.msra.mxu0 %v2366
    %2645 = vmatpush.bf16.msra.mxu0 %v2362
    %2646 = vmatpush.bf16.msra.mxu0 %v2358
    %2647 = vmatpush.bf16.msra.mxu0 %v2354
    %2648 = vmatpush.bf16.msra.mxu0 %v2350
    %2649 = vmatpush.bf16.msra.mxu0 %v2346
    %2650 = vmatpush.bf16.msra.mxu0 %v2342
    %2651 = vmatmul.bf16.gmra.mxu0 %v1721
    %v2652 = vpop.f32.mrf.mxu0
    %v2653 = vadd.f32 %v2640, %v2652
    %v2654 = vpop.f32.mrf.mxu0
    %2655 = vdwg.mxu0
    %2656 = vmatpush.bf16.msra.mxu0 %v2275
    %2657 = vmatpush.bf16.msra.mxu0 %v2271
    %2658 = vmatpush.bf16.msra.mxu0 %v2267
    %2659 = vmatpush.bf16.msra.mxu0 %v2263
    %2660 = vmatpush.bf16.msra.mxu0 %v2259
    %2661 = vmatpush.bf16.msra.mxu0 %v2255
    %2662 = vmatpush.bf16.msra.mxu0 %v2251
    %2663 = vmatpush.bf16.msra.mxu0 %v2247
    %2664 = vmatmul.bf16.gmra.mxu0 %v1718
    %v2665 = vpop.f32.mrf.mxu0
    %v2666 = vadd.f32 %v1855, %v2665
    %v2667 = vpop.f32.mrf.mxu0
    %2668 = vdwg.mxu0
    %2669 = vmatpush.bf16.msra.mxu0 %v2307
    %2670 = vmatpush.bf16.msra.mxu0 %v2303
    %2671 = vmatpush.bf16.msra.mxu0 %v2299
    %2672 = vmatpush.bf16.msra.mxu0 %v2295
    %2673 = vmatpush.bf16.msra.mxu0 %v2291
    %2674 = vmatpush.bf16.msra.mxu0 %v2287
    %2675 = vmatpush.bf16.msra.mxu0 %v2283
    %2676 = vmatpush.bf16.msra.mxu0 %v2279
    %2677 = vmatmul.bf16.gmra.mxu0 %v1719
    %v2678 = vpop.f32.mrf.mxu0
    %v2679 = vadd.f32 %v2666, %v2678
    %v2680 = vpop.f32.mrf.mxu0
    %2681 = vdwg.mxu0
    %2682 = vmatpush.bf16.msra.mxu0 %v2339
    %2683 = vmatpush.bf16.msra.mxu0 %v2335
    %2684 = vmatpush.bf16.msra.mxu0 %v2331
    %2685 = vmatpush.bf16.msra.mxu0 %v2327
    %2686 = vmatpush.bf16.msra.mxu0 %v2323
    %2687 = vmatpush.bf16.msra.mxu0 %v2319
    %2688 = vmatpush.bf16.msra.mxu0 %v2315
    %2689 = vmatpush.bf16.msra.mxu0 %v2311
    %2690 = vmatmul.bf16.gmra.mxu0 %v1720
    %v2691 = vpop.f32.mrf.mxu0
    %v2692 = vadd.f32 %v2679, %v2691
    %v2693 = vpop.f32.mrf.mxu0
    %2694 = vdwg.mxu0
    %2695 = vmatpush.bf16.msra.mxu0 %v2371
    %2696 = vmatpush.bf16.msra.mxu0 %v2367
    %2697 = vmatpush.bf16.msra.mxu0 %v2363
    %2698 = vmatpush.bf16.msra.mxu0 %v2359
    %2699 = vmatpush.bf16.msra.mxu0 %v2355
    %2700 = vmatpush.bf16.msra.mxu0 %v2351
    %2701 = vmatpush.bf16.msra.mxu0 %v2347
    %2702 = vmatpush.bf16.msra.mxu0 %v2343
    %2703 = vmatmul.bf16.gmra.mxu0 %v1721
    %v2704 = vpop.f32.mrf.mxu0
    %v2705 = vadd.f32 %v2692, %v2704
    %v2706 = vpop.f32.mrf.mxu0
    %2707 = vdwg.mxu0
    %v2708 = vsub.f32 0.0, %v2549
    %v2709 = vsub.f32 0.0, %v2601
    %v2710 = vsub.f32 0.0, %v2653
    %v2711 = vsub.f32 0.0, %v2705
    %v2712 = vmul.f32 %v2708, 1.442695
    %v2713 = vpow.pop %v2712
    %v2714 = vmul.f32 %v2709, 1.442695
    %v2715 = vpow.pop %v2714
    %v2716 = vmul.f32 %v2710, 1.442695
    %v2717 = vpow.pop %v2716
    %v2718 = vmul.f32 %v2711, 1.442695
    %v2719 = vpow.pop %v2718
    %v2720 = vadd.f32 %v2713, 1.0
    %v2721 = vadd.f32 %v2715, 1.0
    %v2722 = vadd.f32 %v2717, 1.0
    %v2723 = vadd.f32 %v2719, 1.0
    %v2724 = vrcp.pop %v2720
    %v2725 = vrcp.pop %v2721
    %v2726 = vrcp.pop %v2722
    %v2727 = vrcp.pop %v2723
    %v2728 = vpack.c.bf16 %v2724, %v2724
    %v2729 = vpack.c.bf16 %v2725, %v2725
    %v2730 = vpack.c.bf16 %v2726, %v2726
    %v2731 = vpack.c.bf16 %v2727, %v2727
    %v2732 = vld [vmem:[#allocation11] sm:$0xf]
    %v2733 = vld [vmem:[#allocation11 + $0x4] sm:$0xf]
    %v2734 = vld [vmem:[#allocation11 + $0x8] sm:$0xf]
    %v2735 = vld [vmem:[#allocation11 + $0xc] sm:$0xf]
    %v2736 = vld [vmem:[#allocation11 + $0x10] sm:$0xf]
    %v2737 = vld [vmem:[#allocation11 + $0x14] sm:$0xf]
    %v2738 = vld [vmem:[#allocation11 + $0x18] sm:$0xf]
    %v2739 = vld [vmem:[#allocation11 + $0x1c] sm:$0xf]
    %v2740 = vld [vmem:[#allocation11 + $0x20] sm:$0xf]
    %v2741 = vld [vmem:[#allocation11 + $0x24] sm:$0xf]
    %v2742 = vld [vmem:[#allocation11 + $0x28] sm:$0xf]
    %v2743 = vld [vmem:[#allocation11 + $0x2c] sm:$0xf]
    %v2744 = vld [vmem:[#allocation11 + $0x30] sm:$0xf]
    %v2745 = vld [vmem:[#allocation11 + $0x34] sm:$0xf]
    %v2746 = vld [vmem:[#allocation11 + $0x38] sm:$0xf]
    %v2747 = vld [vmem:[#allocation11 + $0x3c] sm:$0xf]
    %v2748 = vld [vmem:[#allocation11 + $0x40] sm:$0xf]
    %v2749 = vld [vmem:[#allocation11 + $0x44] sm:$0xf]
    %v2750 = vld [vmem:[#allocation11 + $0x48] sm:$0xf]
    %v2751 = vld [vmem:[#allocation11 + $0x4c] sm:$0xf]
    %v2752 = vld [vmem:[#allocation11 + $0x50] sm:$0xf]
    %v2753 = vld [vmem:[#allocation11 + $0x54] sm:$0xf]
    %v2754 = vld [vmem:[#allocation11 + $0x58] sm:$0xf]
    %v2755 = vld [vmem:[#allocation11 + $0x5c] sm:$0xf]
    %v2756 = vld [vmem:[#allocation11 + $0x60] sm:$0xf]
    %v2757 = vld [vmem:[#allocation11 + $0x64] sm:$0xf]
    %v2758 = vld [vmem:[#allocation11 + $0x68] sm:$0xf]
    %v2759 = vld [vmem:[#allocation11 + $0x6c] sm:$0xf]
    %v2760 = vld [vmem:[#allocation11 + $0x70] sm:$0xf]
    %v2761 = vld [vmem:[#allocation11 + $0x74] sm:$0xf]
    %v2762 = vld [vmem:[#allocation11 + $0x78] sm:$0xf]
    %v2763 = vld [vmem:[#allocation11 + $0x7c] sm:$0xf]
    %v2764 = vld [vmem:[#allocation11 + $0x80] sm:$0xf]
    %v2765 = vld [vmem:[#allocation11 + $0x84] sm:$0xf]
    %v2766 = vld [vmem:[#allocation11 + $0x88] sm:$0xf]
    %v2767 = vld [vmem:[#allocation11 + $0x8c] sm:$0xf]
    %v2768 = vld [vmem:[#allocation11 + $0x90] sm:$0xf]
    %v2769 = vld [vmem:[#allocation11 + $0x94] sm:$0xf]
    %v2770 = vld [vmem:[#allocation11 + $0x98] sm:$0xf]
    %v2771 = vld [vmem:[#allocation11 + $0x9c] sm:$0xf]
    %v2772 = vld [vmem:[#allocation11 + $0xa0] sm:$0xf]
    %v2773 = vld [vmem:[#allocation11 + $0xa4] sm:$0xf]
    %v2774 = vld [vmem:[#allocation11 + $0xa8] sm:$0xf]
    %v2775 = vld [vmem:[#allocation11 + $0xac] sm:$0xf]
    %v2776 = vld [vmem:[#allocation11 + $0xb0] sm:$0xf]
    %v2777 = vld [vmem:[#allocation11 + $0xb4] sm:$0xf]
    %v2778 = vld [vmem:[#allocation11 + $0xb8] sm:$0xf]
    %v2779 = vld [vmem:[#allocation11 + $0xbc] sm:$0xf]
    %v2780 = vld [vmem:[#allocation11 + $0xc0] sm:$0xf]
    %v2781 = vld [vmem:[#allocation11 + $0xc4] sm:$0xf]
    %v2782 = vld [vmem:[#allocation11 + $0xc8] sm:$0xf]
    %v2783 = vld [vmem:[#allocation11 + $0xcc] sm:$0xf]
    %v2784 = vld [vmem:[#allocation11 + $0xd0] sm:$0xf]
    %v2785 = vld [vmem:[#allocation11 + $0xd4] sm:$0xf]
    %v2786 = vld [vmem:[#allocation11 + $0xd8] sm:$0xf]
    %v2787 = vld [vmem:[#allocation11 + $0xdc] sm:$0xf]
    %v2788 = vld [vmem:[#allocation11 + $0xe0] sm:$0xf]
    %v2789 = vld [vmem:[#allocation11 + $0xe4] sm:$0xf]
    %v2790 = vld [vmem:[#allocation11 + $0xe8] sm:$0xf]
    %v2791 = vld [vmem:[#allocation11 + $0xec] sm:$0xf]
    %v2792 = vld [vmem:[#allocation11 + $0xf0] sm:$0xf]
    %v2793 = vld [vmem:[#allocation11 + $0xf4] sm:$0xf]
    %v2794 = vld [vmem:[#allocation11 + $0xf8] sm:$0xf]
    %v2795 = vld [vmem:[#allocation11 + $0xfc] sm:$0xf]
    %v2796 = vld [vmem:[%s6] sm:$0x1]
    %v2798 = vperm.slane %v2796, 0
    %v2864 = vunpack.c.l.b16 %v2732
    %v2865 = vunpack.c.l.b16 %v2733
    %v2866 = vunpack.c.l.b16 %v2734
    %v2867 = vunpack.c.l.b16 %v2735
    %v2868 = vunpack.c.l.b16 %v2736
    %v2869 = vunpack.c.l.b16 %v2737
    %v2870 = vunpack.c.l.b16 %v2738
    %v2871 = vunpack.c.l.b16 %v2739
    %v2872 = vunpack.c.l.b16 %v2740
    %v2873 = vunpack.c.l.b16 %v2741
    %v2874 = vunpack.c.l.b16 %v2742
    %v2875 = vunpack.c.l.b16 %v2743
    %v2876 = vunpack.c.l.b16 %v2744
    %v2877 = vunpack.c.l.b16 %v2745
    %v2878 = vunpack.c.l.b16 %v2746
    %v2879 = vunpack.c.l.b16 %v2747
    %v2880 = vunpack.c.l.b16 %v2748
    %v2881 = vunpack.c.l.b16 %v2749
    %v2882 = vunpack.c.l.b16 %v2750
    %v2883 = vunpack.c.l.b16 %v2751
    %v2884 = vunpack.c.l.b16 %v2752
    %v2885 = vunpack.c.l.b16 %v2753
    %v2886 = vunpack.c.l.b16 %v2754
    %v2887 = vunpack.c.l.b16 %v2755
    %v2888 = vunpack.c.l.b16 %v2756
    %v2889 = vunpack.c.l.b16 %v2757
    %v2890 = vunpack.c.l.b16 %v2758
    %v2891 = vunpack.c.l.b16 %v2759
    %v2892 = vunpack.c.l.b16 %v2760
    %v2893 = vunpack.c.l.b16 %v2761
    %v2894 = vunpack.c.l.b16 %v2762
    %v2895 = vunpack.c.l.b16 %v2763
    %v2896 = vunpack.c.l.b16 %v2764
    %v2897 = vunpack.c.l.b16 %v2765
    %v2898 = vunpack.c.l.b16 %v2766
    %v2899 = vunpack.c.l.b16 %v2767
    %v2900 = vunpack.c.l.b16 %v2768
    %v2901 = vunpack.c.l.b16 %v2769
    %v2902 = vunpack.c.l.b16 %v2770
    %v2903 = vunpack.c.l.b16 %v2771
    %v2904 = vunpack.c.l.b16 %v2772
    %v2905 = vunpack.c.l.b16 %v2773
    %v2906 = vunpack.c.l.b16 %v2774
    %v2907 = vunpack.c.l.b16 %v2775
    %v2908 = vunpack.c.l.b16 %v2776
    %v2909 = vunpack.c.l.b16 %v2777
    %v2910 = vunpack.c.l.b16 %v2778
    %v2911 = vunpack.c.l.b16 %v2779
    %v2912 = vunpack.c.l.b16 %v2780
    %v2913 = vunpack.c.l.b16 %v2781
    %v2914 = vunpack.c.l.b16 %v2782
    %v2915 = vunpack.c.l.b16 %v2783
    %v2916 = vunpack.c.l.b16 %v2784
    %v2917 = vunpack.c.l.b16 %v2785
    %v2918 = vunpack.c.l.b16 %v2786
    %v2919 = vunpack.c.l.b16 %v2787
    %v2920 = vunpack.c.l.b16 %v2788
    %v2921 = vunpack.c.l.b16 %v2789
    %v2922 = vunpack.c.l.b16 %v2790
    %v2923 = vunpack.c.l.b16 %v2791
    %v2924 = vunpack.c.l.b16 %v2792
    %v2925 = vunpack.c.l.b16 %v2793
    %v2926 = vunpack.c.l.b16 %v2794
    %v2927 = vunpack.c.l.b16 %v2795
    %v2928 = vpack.c.b16 %v2865, %v2864
    %v2929 = vpack.c.b16 %v2867, %v2866
    %v2930 = vpack.c.b16 %v2869, %v2868
    %v2931 = vpack.c.b16 %v2871, %v2870
    %v2932 = vpack.c.b16 %v2873, %v2872
    %v2933 = vpack.c.b16 %v2875, %v2874
    %v2934 = vpack.c.b16 %v2877, %v2876
    %v2935 = vpack.c.b16 %v2879, %v2878
    %v2936 = vpack.c.b16 %v2881, %v2880
    %v2937 = vpack.c.b16 %v2883, %v2882
    %v2938 = vpack.c.b16 %v2885, %v2884
    %v2939 = vpack.c.b16 %v2887, %v2886
    %v2940 = vpack.c.b16 %v2889, %v2888
    %v2941 = vpack.c.b16 %v2891, %v2890
    %v2942 = vpack.c.b16 %v2893, %v2892
    %v2943 = vpack.c.b16 %v2895, %v2894
    %v2944 = vpack.c.b16 %v2897, %v2896
    %v2945 = vpack.c.b16 %v2899, %v2898
    %v2946 = vpack.c.b16 %v2901, %v2900
    %v2947 = vpack.c.b16 %v2903, %v2902
    %v2948 = vpack.c.b16 %v2905, %v2904
    %v2949 = vpack.c.b16 %v2907, %v2906
    %v2950 = vpack.c.b16 %v2909, %v2908
    %v2951 = vpack.c.b16 %v2911, %v2910
    %v2952 = vpack.c.b16 %v2913, %v2912
    %v2953 = vpack.c.b16 %v2915, %v2914
    %v2954 = vpack.c.b16 %v2917, %v2916
    %v2955 = vpack.c.b16 %v2919, %v2918
    %v2956 = vpack.c.b16 %v2921, %v2920
    %v2957 = vpack.c.b16 %v2923, %v2922
    %v2958 = vpack.c.b16 %v2925, %v2924
    %v2959 = vpack.c.b16 %v2927, %v2926
    %2992 = vmatpush.bf16.msra.mxu0 %v2935
    %2993 = vmatpush.bf16.msra.mxu0 %v2934
    %2994 = vmatpush.bf16.msra.mxu0 %v2933
    %2995 = vmatpush.bf16.msra.mxu0 %v2932
    %2996 = vmatpush.bf16.msra.mxu0 %v2931
    %2997 = vmatpush.bf16.msra.mxu0 %v2930
    %2998 = vmatpush.bf16.msra.mxu0 %v2929
    %2999 = vmatpush.bf16.msra.mxu0 %v2928
    %3000 = vmatmul.bf16.gmra.mxu0 %v2728
    %v3001 = vpop.f32.mrf.mxu0
    %v3002 = vadd.f32 %v2798, %v3001
    %v3003 = vpop.f32.mrf.mxu0
    %3004 = vdwg.mxu0
    %3005 = vmatpush.bf16.msra.mxu0 %v2943
    %3006 = vmatpush.bf16.msra.mxu0 %v2942
    %3007 = vmatpush.bf16.msra.mxu0 %v2941
    %3008 = vmatpush.bf16.msra.mxu0 %v2940
    %3009 = vmatpush.bf16.msra.mxu0 %v2939
    %3010 = vmatpush.bf16.msra.mxu0 %v2938
    %3011 = vmatpush.bf16.msra.mxu0 %v2937
    %3012 = vmatpush.bf16.msra.mxu0 %v2936
    %3013 = vmatmul.bf16.gmra.mxu0 %v2729
    %v3014 = vpop.f32.mrf.mxu0
    %v3015 = vadd.f32 %v3002, %v3014
    %v3016 = vpop.f32.mrf.mxu0
    %3017 = vdwg.mxu0
    %3018 = vmatpush.bf16.msra.mxu0 %v2951
    %3019 = vmatpush.bf16.msra.mxu0 %v2950
    %3020 = vmatpush.bf16.msra.mxu0 %v2949
    %3021 = vmatpush.bf16.msra.mxu0 %v2948
    %3022 = vmatpush.bf16.msra.mxu0 %v2947
    %3023 = vmatpush.bf16.msra.mxu0 %v2946
    %3024 = vmatpush.bf16.msra.mxu0 %v2945
    %3025 = vmatpush.bf16.msra.mxu0 %v2944
    %3026 = vmatmul.bf16.gmra.mxu0 %v2730
    %v3027 = vpop.f32.mrf.mxu0
    %v3028 = vadd.f32 %v3015, %v3027
    %v3029 = vpop.f32.mrf.mxu0
    %3030 = vdwg.mxu0
    %3031 = vmatpush.bf16.msra.mxu0 %v2959
    %3032 = vmatpush.bf16.msra.mxu0 %v2958
    %3033 = vmatpush.bf16.msra.mxu0 %v2957
    %3034 = vmatpush.bf16.msra.mxu0 %v2956
    %3035 = vmatpush.bf16.msra.mxu0 %v2955
    %3036 = vmatpush.bf16.msra.mxu0 %v2954
    %3037 = vmatpush.bf16.msra.mxu0 %v2953
    %3038 = vmatpush.bf16.msra.mxu0 %v2952
    %3039 = vmatmul.bf16.gmra.mxu0 %v2731
    %v3040 = vpop.f32.mrf.mxu0
    %v3041 = vadd.f32 %v3028, %v3040
    %v3042 = vpop.f32.mrf.mxu0
    %3043 = vdwg.mxu0
    %v3044 = vlaneseq
    %v3045 = vand.u32 %v3044, 127
    %vm3046 = vcmp.lt.s32.totalorder %v3045, 10
    %v3047 = vsel %vm3046, %v3041, -inf
    %vm3048 = vcmask 1041408
    %v3049 = vsel %vm3048, %v3047, -inf
    %3050 = vmax.xlane.f32.xlu0 %v3049
    %v3051 = vpop.xlane.xlu0 %3050
    %v3052 = vsub.f32 %v3047, %v3051
    %v3053 = vmul.f32 %v3052, 1.442695
    %v3054 = vpow.pop %v3053
    %v3055 = vsel %vm3048, %v3054, 0.0
    %3056 = vadd.xlane.f32.xlu0 %v3055
    %v3057 = vpop.xlane.xlu0 %3056
    %v3058 = vlog2.pop %v3057
    %v3059 = vmul.f32 %v3058, 0.6931472
    %v3060 = vsub.f32 %v3052, %v3059
    %v3061 = vpack.c.bf16 %v3060, %v3060
    %3062 = vst [vmem:[#allocation13] sm:$0x1] %v3061
    // Predicated region
    $region54: #{tpu_custom_call.1} parent=1 // pred_check
      _
    $region55: #{tpu_custom_call.1} parent=1 // pred_check_branch
      %3064 = sbr.rel (0) target = $region57
    $region56: #{tpu_custom_call.1} parent=1 // pred_region
      %3066 = vsyncadd [#allocation4], 0
      %s3068 = sshll.u32 [#allocation13], 4
      %s3069 = int_to_ptr.vmem [resolvable:$true] %s3068
      %s3070 = sshll.u32 %s7, 4
      %s3071 = int_to_ptr.hbm [resolvable:$true] %s3070
      %3073 = dma.vmem_to_hbm [thread:$0]  %s3069, 16, %s3071, [#allocation4]
    $region57: #{tpu_custom_call.1} parent=1 // pred_fallthru
      _
    // Predicated region
    $region58: #{tpu_custom_call.1} parent=1 // pred_check
      _
    $region59: #{tpu_custom_call.1} parent=1 // pred_check_branch
      %3075 = sbr.rel (0) target = $region61
    $region60: #{tpu_custom_call.1} parent=1 // pred_region
      %3077 = dma.done [#allocation4], 16
    $region61: #{tpu_custom_call.1} parent=1 // pred_fallthru
      _
    %3078 = vsyncpa [#allocation3], 1
    %3079 = vsyncpa [#allocation6], 1
    %3080 = vsyncpa [#allocation9], 1
    %3081 = vsyncpa [#allocation12], 1
    %3082 = vsyncpa [#allocation4], 1

</llo_original>
